<compile_context>
chip_gen: v7x
topology: tpu7x:2x2x1
jax: 0.10.0
libtpu: 0.0.40
codegen_flags: <defaults>
</compile_context>

<pallas_src>
import functools
import math

import jax
import jax.numpy as jnp
from jax.experimental import pallas as pl
from jax.experimental.pallas import tpu as pltpu


def _mi_kernel(pha_ref, amp_ref, out_ref, *, n_bins, epsilon):
    """One (batch*channel) element: all Fp x Fa MI values, averaged over segments.

    pha_ref: (1, Fp, S, T) f32   amp_ref: (1, Fa, S, T) f32   out_ref: (1, Fp, Fa) f32
    """
    _, Fp, S, T = pha_ref.shape
    Fa = amp_ref.shape[1]
    N = Fp * n_bins                       # packed (phase-row, bin) axis

    log_n = math.log(float(n_bins))
    scale = float(n_bins) / (2.0 * math.pi)
    eps = jnp.float32(epsilon)

    # ---- constants (hoisted out of the segment loop) -------------------------
    # rep[r, g] = 1 iff packed row r belongs to phase-frequency g  (r // n_bins == g)
    r_io = jax.lax.broadcasted_iota(jnp.int32, (N, Fp), 0)
    g_io = jax.lax.broadcasted_iota(jnp.int32, (N, Fp), 1)
    in_group = (r_io >= g_io * n_bins) & (r_io < (g_io + 1) * n_bins)
    rep = in_group.astype(jnp.float32)                                    # (N, Fp)
    # n_of_r[r] = bin index encoded by packed row r (== r mod n_bins), no int div.
    n_of_r = jnp.sum(
        jnp.where(in_group, (r_io - g_io * n_bins).astype(jnp.float32), 0.0),
        axis=1, keepdims=True)                                            # (N, 1)
    ones_row = jnp.ones((1, T), jnp.float32)

    acc = jnp.zeros((Fp, Fa), jnp.float32)

    # TODO(synk): for very large S*T, chunk segments / time onto an extra grid axis
    # (accumulating sums/counts across T tiles) instead of one in-kernel loop.
    for j in range(S):
        pha_j = pha_ref[0, :, j, :]                                       # (Fp, T)
        amp_j = amp_ref[0, :, j, :]                                       # (Fa, T)

        # Arithmetic binning on uniform [-pi, pi] bins (replaces torch.bucketize;
        # differs only for phases exactly on an interior cutoff — measure zero).
        idx_f = jnp.clip(jnp.floor((pha_j + math.pi) * scale),
                         0.0, float(n_bins - 1))                          # (Fp, T)

        # Replicate each phase row's bin index to its n_bins packed rows (MXU;
        # values are exact small integers so the comparison below is robust).
        idx_rep = jax.lax.dot_general(
            rep, idx_f, (((1,), (0,)), ((), ())),
            preferred_element_type=jnp.float32)                           # (N, T)
        # One-hot with T on the lane axis, packed (Fp*n_bins) rows on sublanes.
        onehot = (jnp.abs(idx_rep - n_of_r) < 0.5).astype(jnp.float32)    # (N, T)

        # Per-bin amplitude sums and bin counts: MXU contractions over T.
        sums = jax.lax.dot_general(
            amp_j, onehot, (((1,), (1,)), ((), ())),
            preferred_element_type=jnp.float32)                           # (Fa, N)
        counts = jax.lax.dot_general(
            ones_row, onehot, (((1,), (1,)), ((), ())),
            preferred_element_type=jnp.float32)                           # (1, N)

        means = sums / (counts + eps)                                     # (Fa, N)
        # Per-(fp) normalization: sum over the n_bins chunk of each packed group,
        # then broadcast the group sum back to every row of that group.
        gsum = jax.lax.dot_general(
            means, rep, (((1,), (0,)), ((), ())),
            preferred_element_type=jnp.float32)                           # (Fa, Fp)
        denom = jax.lax.dot_general(
            gsum, rep, (((1,), (1,)), ((), ())),
            preferred_element_type=jnp.float32)                           # (Fa, N)
        probs = means / (denom + eps)
        plogp = probs * jnp.log(probs + eps)
        kl = jax.lax.dot_general(
            rep, plogp, (((0,), (1,)), ((), ())),
            preferred_element_type=jnp.float32)                           # (Fp, Fa)

        acc = acc + (log_n + kl) / log_n

    mi = acc * jnp.float32(1.0 / S)
    # torch path replaces NaN (after the segment mean) with 0.0.
    mi = jnp.where(jnp.isnan(mi), jnp.float32(0.0), mi)
    out_ref[0, :, :] = mi.astype(out_ref.dtype)


def modulation_index(pha, amp, *, n_bins=18, epsilon=1e-9):
    """Pallas TPU implementation of ModulationIndex.forward (fp16=False, amp_prob=False)."""
    B, C, Fp, S, T = pha.shape
    Fa = amp.shape[2]
    assert amp.shape == (B, C, Fa, S, T)
    BC = B * C

    # Pure reshapes only — no host-side transpose/copy of amp or pha.
    pha32 = pha.astype(jnp.float32).reshape(BC, Fp, S, T)
    amp32 = amp.astype(jnp.float32).reshape(BC, Fa, S, T)

    kernel = functools.partial(_mi_kernel, n_bins=n_bins, epsilon=float(epsilon))

    out = pl.pallas_call(
        kernel,
        out_shape=jax.ShapeDtypeStruct((BC, Fp, Fa), jnp.float32),
        grid_spec=pltpu.PrefetchScalarGridSpec(
            num_scalar_prefetch=0,
            grid=(BC,),
            in_specs=[
                pl.BlockSpec((1, Fp, S, T), lambda i: (i, 0, 0, 0)),   # pha tile
                pl.BlockSpec((1, Fa, S, T), lambda i: (i, 0, 0, 0)),   # amp tile
            ],
            out_specs=pl.BlockSpec((1, Fp, Fa), lambda i: (i, 0, 0)),
        ),
        compiler_params=pltpu.CompilerParams(
            dimension_semantics=("parallel",)),
    )(pha32, amp32)

    return out.reshape(B, C, Fp, Fa).astype(amp.dtype)


def modulation_index_ref(pha, amp, *, n_bins=18, epsilon=1e-9):
    """Pure-JAX reference mirroring the PyTorch forward exactly."""
    cutoffs = jnp.linspace(-math.pi, math.pi, n_bins + 1, dtype=jnp.float32)
    pha = pha.astype(jnp.float32)
    amp = amp.astype(jnp.float32)
    bin_idx = jnp.searchsorted(cutoffs, pha, side='left') - 1
    bin_idx = jnp.clip(bin_idx, 0, n_bins - 1)
    onehot = jax.nn.one_hot(bin_idx, n_bins, dtype=jnp.float32)   # (B,C,Fp,S,T,nb)
    amp_e = amp[:, :, None, :, :, :, None]                        # (B,C,1,Fa,S,T,1)
    mask_e = onehot[:, :, :, None]                                # (B,C,Fp,1,S,T,nb)
    sums = (mask_e * amp_e).sum(axis=5, keepdims=True)
    counts = mask_e.sum(axis=5, keepdims=True)
    means = sums / (counts + epsilon)
    probs = means / (means.sum(axis=-1, keepdims=True) + epsilon)
    log_n = jnp.log(jnp.float32(n_bins))
    kl = (probs * jnp.log(probs + epsilon)).sum(axis=-1)
    mi = (log_n + kl) / log_n
    mi = jnp.squeeze(mi, axis=5).mean(axis=4)
    mi = jnp.where(jnp.isnan(mi), 0.0, mi)
    return mi.astype(amp.dtype)


if __name__ == "__main__":
    # Small shapes consistent with the 5D (batch, channels, freqs, segments, time) layout.
    B, C, Fp, Fa, S, T = 2, 4, 3, 2, 4, 64
    key = jax.random.PRNGKey(0)
    kp, ka = jax.random.split(key)
    pha = jax.random.uniform(kp, (B, C, Fp, S, T), minval=-math.pi, maxval=math.pi,
                             dtype=jnp.float32)
    amp = jax.random.uniform(ka, (B, C, Fa, S, T), minval=0.0, maxval=2.0,
                             dtype=jnp.float32)

    mi_kernel = jax.block_until_ready(modulation_index(pha, amp))
    mi_ref = jax.block_until_ready(modulation_index_ref(pha, amp))

    assert mi_kernel.shape == (B, C, Fp, Fa)
    assert mi_kernel.dtype == jnp.float32
    assert jnp.allclose(mi_kernel, mi_ref, rtol=1e-5, atol=1e-5), (
        f"mismatch: max abs diff {jnp.max(jnp.abs(mi_kernel - mi_ref))}")

    print("KERNEL_OK")
</pallas_src>

<mosaic_0001>
module attributes {stable_mosaic.version = 11 : i64} {
  func.func @_mi_kernel(%arg0: i32, %arg1: memref<1x3x4x64xf32, #tpu.memory_space<vmem>>, %arg2: memref<1x2x4x64xf32, #tpu.memory_space<vmem>>, %arg3: memref<1x3x2xf32, #tpu.memory_space<vmem>>) attributes {dimension_semantics = [#tpu.dimension_semantics<parallel>], iteration_bounds = array<i64: 8>, scalar_prefetch = 0 : i64, scratch_operands = 0 : i64, tpu.core_type = #tpu.core_type<tc>, window_params = [{transform_indices = @transform_0, window_bounds = array<i64: 1, 3, 4, 64>}, {transform_indices = @transform_1, window_bounds = array<i64: 1, 2, 4, 64>}, {transform_indices = @transform_2, window_bounds = array<i64: 1, 3, 2>}]} {
    %0 = tpu.iota {dimensions = array<i32: 0>} : vector<54x3xi32>
    %1 = tpu.iota {dimensions = array<i32: 1>} : vector<54x3xi32>
    %c18_i32 = arith.constant 18 : i32
    %2 = vector.broadcast %c18_i32 : i32 to vector<54x3xi32>
    %3 = arith.muli %1, %2 : vector<54x3xi32>
    %4 = arith.cmpi sge, %0, %3 : vector<54x3xi32>
    %c1_i32 = arith.constant 1 : i32
    %5 = vector.broadcast %c1_i32 : i32 to vector<54x3xi32>
    %6 = arith.addi %1, %5 : vector<54x3xi32>
    %c18_i32_0 = arith.constant 18 : i32
    %7 = vector.broadcast %c18_i32_0 : i32 to vector<54x3xi32>
    %8 = arith.muli %6, %7 : vector<54x3xi32>
    %9 = arith.cmpi slt, %0, %8 : vector<54x3xi32>
    %10 = arith.andi %4, %9 : vector<54x3xi1>
    %11 = arith.extui %10 : vector<54x3xi1> to vector<54x3xi32>
    %12 = arith.sitofp %11 : vector<54x3xi32> to vector<54x3xf32>
    %c18_i32_1 = arith.constant 18 : i32
    %13 = vector.broadcast %c18_i32_1 : i32 to vector<54x3xi32>
    %14 = arith.muli %1, %13 : vector<54x3xi32>
    %15 = arith.subi %0, %14 : vector<54x3xi32>
    %16 = arith.sitofp %15 : vector<54x3xi32> to vector<54x3xf32>
    %cst = arith.constant 0.000000e+00 : f32
    %17 = vector.broadcast %cst : f32 to vector<54x3xf32>
    %18 = arith.select %10, %16, %17 : vector<54x3xi1>, vector<54x3xf32>
    %cst_2 = arith.constant dense<0.000000e+00> : vector<54xf32>
    %19 = vector.multi_reduction <add>, %18, %cst_2 [1] : vector<54x3xf32> to vector<54xf32>
    %20 = vector.shape_cast %19 : vector<54xf32> to vector<54x1xf32>
    %cst_3 = arith.constant 1.000000e+00 : f32
    %21 = vector.broadcast %cst_3 : f32 to vector<1x64xf32>
    %cst_4 = arith.constant 0.000000e+00 : f32
    %22 = vector.broadcast %cst_4 : f32 to vector<3x2xf32>
    %c0 = arith.constant 0 : index
    %c0_5 = arith.constant 0 : index
    %c0_6 = arith.constant 0 : index
    %c0_7 = arith.constant 0 : index
    %23 = vector.load %arg1[%c0, %c0_5, %c0_6, %c0_7] : memref<1x3x4x64xf32, #tpu.memory_space<vmem>>, vector<1x3x1x64xf32>
    %24 = vector.shape_cast %23 : vector<1x3x1x64xf32> to vector<3x64xf32>
    %c0_8 = arith.constant 0 : index
    %c0_9 = arith.constant 0 : index
    %c0_10 = arith.constant 0 : index
    %c0_11 = arith.constant 0 : index
    %25 = vector.load %arg2[%c0_8, %c0_9, %c0_10, %c0_11] : memref<1x2x4x64xf32, #tpu.memory_space<vmem>>, vector<1x2x1x64xf32>
    %26 = vector.shape_cast %25 : vector<1x2x1x64xf32> to vector<2x64xf32>
    %cst_12 = arith.constant 3.14159274 : f32
    %27 = vector.broadcast %cst_12 : f32 to vector<3x64xf32>
    %28 = arith.addf %24, %27 : vector<3x64xf32>
    %cst_13 = arith.constant 2.86478901 : f32
    %29 = vector.broadcast %cst_13 : f32 to vector<3x64xf32>
    %30 = arith.mulf %28, %29 : vector<3x64xf32>
    %31 = math.floor %30 : vector<3x64xf32>
    %cst_14 = arith.constant 0.000000e+00 : f32
    %cst_15 = arith.constant 1.700000e+01 : f32
    %32 = vector.broadcast %cst_14 : f32 to vector<3x64xf32>
    %33 = arith.maximumf %32, %31 : vector<3x64xf32>
    %34 = vector.broadcast %cst_15 : f32 to vector<3x64xf32>
    %35 = arith.minimumf %34, %33 : vector<3x64xf32>
    %cst_16 = arith.constant dense<0.000000e+00> : vector<54x64xf32>
    %36 = tpu.matmul %12, %35, %cst_16 {dimension_numbers = #tpu.dot_dimension_numbers<[1], [0], [0], [1], [0, 0, 1, 1], [], []>} : vector<54x3xf32>, vector<3x64xf32>, vector<54x64xf32> -> vector<54x64xf32>
    %37 = vector.broadcast %20 : vector<54x1xf32> to vector<54x64xf32>
    %38 = arith.subf %36, %37 : vector<54x64xf32>
    %39 = math.absf %38 : vector<54x64xf32>
    %cst_17 = arith.constant 5.000000e-01 : f32
    %40 = vector.broadcast %cst_17 : f32 to vector<54x64xf32>
    %41 = arith.cmpf olt, %39, %40 : vector<54x64xf32>
    %42 = arith.extui %41 : vector<54x64xi1> to vector<54x64xi32>
    %43 = arith.sitofp %42 : vector<54x64xi32> to vector<54x64xf32>
    %cst_18 = arith.constant dense<0.000000e+00> : vector<2x54xf32>
    %44 = tpu.matmul %26, %43, %cst_18 {dimension_numbers = #tpu.dot_dimension_numbers<[1], [1], [0], [0], [0, 0, 1, 0], [], []>} : vector<2x64xf32>, vector<54x64xf32>, vector<2x54xf32> -> vector<2x54xf32>
    %cst_19 = arith.constant dense<0.000000e+00> : vector<1x54xf32>
    %45 = tpu.matmul %21, %43, %cst_19 {dimension_numbers = #tpu.dot_dimension_numbers<[1], [1], [0], [0], [0, 0, 1, 0], [], []>} : vector<1x64xf32>, vector<54x64xf32>, vector<1x54xf32> -> vector<1x54xf32>
    %cst_20 = arith.constant 9.99999971E-10 : f32
    %46 = vector.broadcast %cst_20 : f32 to vector<1x54xf32>
    %47 = arith.addf %45, %46 : vector<1x54xf32>
    %48 = vector.broadcast %47 : vector<1x54xf32> to vector<2x54xf32>
    %49 = arith.divf %44, %48 : vector<2x54xf32>
    %cst_21 = arith.constant dense<0.000000e+00> : vector<2x3xf32>
    %50 = tpu.matmul %49, %12, %cst_21 {dimension_numbers = #tpu.dot_dimension_numbers<[1], [0], [0], [1], [0, 0, 1, 1], [], []>} : vector<2x54xf32>, vector<54x3xf32>, vector<2x3xf32> -> vector<2x3xf32>
    %cst_22 = arith.constant dense<0.000000e+00> : vector<2x54xf32>
    %51 = tpu.matmul %50, %12, %cst_22 {dimension_numbers = #tpu.dot_dimension_numbers<[1], [1], [0], [0], [0, 0, 1, 0], [], []>} : vector<2x3xf32>, vector<54x3xf32>, vector<2x54xf32> -> vector<2x54xf32>
    %cst_23 = arith.constant 9.99999971E-10 : f32
    %52 = vector.broadcast %cst_23 : f32 to vector<2x54xf32>
    %53 = arith.addf %51, %52 : vector<2x54xf32>
    %54 = arith.divf %49, %53 : vector<2x54xf32>
    %cst_24 = arith.constant 9.99999971E-10 : f32
    %55 = vector.broadcast %cst_24 : f32 to vector<2x54xf32>
    %56 = arith.addf %54, %55 : vector<2x54xf32>
    %57 = math.log %56 : vector<2x54xf32>
    %58 = arith.mulf %54, %57 : vector<2x54xf32>
    %cst_25 = arith.constant dense<0.000000e+00> : vector<3x2xf32>
    %59 = tpu.matmul %12, %58, %cst_25 {dimension_numbers = #tpu.dot_dimension_numbers<[0], [1], [1], [0], [0, 1, 1, 0], [], []>} : vector<54x3xf32>, vector<2x54xf32>, vector<3x2xf32> -> vector<3x2xf32>
    %cst_26 = arith.constant 2.8903718 : f32
    %60 = vector.broadcast %cst_26 : f32 to vector<3x2xf32>
    %61 = arith.addf %60, %59 : vector<3x2xf32>
    %cst_27 = arith.constant 2.8903718 : f32
    %62 = vector.broadcast %cst_27 : f32 to vector<3x2xf32>
    %63 = arith.divf %61, %62 : vector<3x2xf32>
    %64 = arith.addf %22, %63 : vector<3x2xf32>
    %c0_28 = arith.constant 0 : index
    %c0_29 = arith.constant 0 : index
    %c1 = arith.constant 1 : index
    %c0_30 = arith.constant 0 : index
    %65 = vector.load %arg1[%c0_28, %c0_29, %c1, %c0_30] : memref<1x3x4x64xf32, #tpu.memory_space<vmem>>, vector<1x3x1x64xf32>
    %66 = vector.shape_cast %65 : vector<1x3x1x64xf32> to vector<3x64xf32>
    %c0_31 = arith.constant 0 : index
    %c0_32 = arith.constant 0 : index
    %c1_33 = arith.constant 1 : index
    %c0_34 = arith.constant 0 : index
    %67 = vector.load %arg2[%c0_31, %c0_32, %c1_33, %c0_34] : memref<1x2x4x64xf32, #tpu.memory_space<vmem>>, vector<1x2x1x64xf32>
    %68 = vector.shape_cast %67 : vector<1x2x1x64xf32> to vector<2x64xf32>
    %cst_35 = arith.constant 3.14159274 : f32
    %69 = vector.broadcast %cst_35 : f32 to vector<3x64xf32>
    %70 = arith.addf %66, %69 : vector<3x64xf32>
    %cst_36 = arith.constant 2.86478901 : f32
    %71 = vector.broadcast %cst_36 : f32 to vector<3x64xf32>
    %72 = arith.mulf %70, %71 : vector<3x64xf32>
    %73 = math.floor %72 : vector<3x64xf32>
    %cst_37 = arith.constant 0.000000e+00 : f32
    %cst_38 = arith.constant 1.700000e+01 : f32
    %74 = vector.broadcast %cst_37 : f32 to vector<3x64xf32>
    %75 = arith.maximumf %74, %73 : vector<3x64xf32>
    %76 = vector.broadcast %cst_38 : f32 to vector<3x64xf32>
    %77 = arith.minimumf %76, %75 : vector<3x64xf32>
    %cst_39 = arith.constant dense<0.000000e+00> : vector<54x64xf32>
    %78 = tpu.matmul %12, %77, %cst_39 {dimension_numbers = #tpu.dot_dimension_numbers<[1], [0], [0], [1], [0, 0, 1, 1], [], []>} : vector<54x3xf32>, vector<3x64xf32>, vector<54x64xf32> -> vector<54x64xf32>
    %79 = vector.broadcast %20 : vector<54x1xf32> to vector<54x64xf32>
    %80 = arith.subf %78, %79 : vector<54x64xf32>
    %81 = math.absf %80 : vector<54x64xf32>
    %cst_40 = arith.constant 5.000000e-01 : f32
    %82 = vector.broadcast %cst_40 : f32 to vector<54x64xf32>
    %83 = arith.cmpf olt, %81, %82 : vector<54x64xf32>
    %84 = arith.extui %83 : vector<54x64xi1> to vector<54x64xi32>
    %85 = arith.sitofp %84 : vector<54x64xi32> to vector<54x64xf32>
    %cst_41 = arith.constant dense<0.000000e+00> : vector<2x54xf32>
    %86 = tpu.matmul %68, %85, %cst_41 {dimension_numbers = #tpu.dot_dimension_numbers<[1], [1], [0], [0], [0, 0, 1, 0], [], []>} : vector<2x64xf32>, vector<54x64xf32>, vector<2x54xf32> -> vector<2x54xf32>
    %cst_42 = arith.constant dense<0.000000e+00> : vector<1x54xf32>
    %87 = tpu.matmul %21, %85, %cst_42 {dimension_numbers = #tpu.dot_dimension_numbers<[1], [1], [0], [0], [0, 0, 1, 0], [], []>} : vector<1x64xf32>, vector<54x64xf32>, vector<1x54xf32> -> vector<1x54xf32>
    %cst_43 = arith.constant 9.99999971E-10 : f32
    %88 = vector.broadcast %cst_43 : f32 to vector<1x54xf32>
    %89 = arith.addf %87, %88 : vector<1x54xf32>
    %90 = vector.broadcast %89 : vector<1x54xf32> to vector<2x54xf32>
    %91 = arith.divf %86, %90 : vector<2x54xf32>
    %cst_44 = arith.constant dense<0.000000e+00> : vector<2x3xf32>
    %92 = tpu.matmul %91, %12, %cst_44 {dimension_numbers = #tpu.dot_dimension_numbers<[1], [0], [0], [1], [0, 0, 1, 1], [], []>} : vector<2x54xf32>, vector<54x3xf32>, vector<2x3xf32> -> vector<2x3xf32>
    %cst_45 = arith.constant dense<0.000000e+00> : vector<2x54xf32>
    %93 = tpu.matmul %92, %12, %cst_45 {dimension_numbers = #tpu.dot_dimension_numbers<[1], [1], [0], [0], [0, 0, 1, 0], [], []>} : vector<2x3xf32>, vector<54x3xf32>, vector<2x54xf32> -> vector<2x54xf32>
    %cst_46 = arith.constant 9.99999971E-10 : f32
    %94 = vector.broadcast %cst_46 : f32 to vector<2x54xf32>
    %95 = arith.addf %93, %94 : vector<2x54xf32>
    %96 = arith.divf %91, %95 : vector<2x54xf32>
    %cst_47 = arith.constant 9.99999971E-10 : f32
    %97 = vector.broadcast %cst_47 : f32 to vector<2x54xf32>
    %98 = arith.addf %96, %97 : vector<2x54xf32>
    %99 = math.log %98 : vector<2x54xf32>
    %100 = arith.mulf %96, %99 : vector<2x54xf32>
    %cst_48 = arith.constant dense<0.000000e+00> : vector<3x2xf32>
    %101 = tpu.matmul %12, %100, %cst_48 {dimension_numbers = #tpu.dot_dimension_numbers<[0], [1], [1], [0], [0, 1, 1, 0], [], []>} : vector<54x3xf32>, vector<2x54xf32>, vector<3x2xf32> -> vector<3x2xf32>
    %cst_49 = arith.constant 2.8903718 : f32
    %102 = vector.broadcast %cst_49 : f32 to vector<3x2xf32>
    %103 = arith.addf %102, %101 : vector<3x2xf32>
    %cst_50 = arith.constant 2.8903718 : f32
    %104 = vector.broadcast %cst_50 : f32 to vector<3x2xf32>
    %105 = arith.divf %103, %104 : vector<3x2xf32>
    %106 = arith.addf %64, %105 : vector<3x2xf32>
    %c0_51 = arith.constant 0 : index
    %c0_52 = arith.constant 0 : index
    %c2 = arith.constant 2 : index
    %c0_53 = arith.constant 0 : index
    %107 = vector.load %arg1[%c0_51, %c0_52, %c2, %c0_53] : memref<1x3x4x64xf32, #tpu.memory_space<vmem>>, vector<1x3x1x64xf32>
    %108 = vector.shape_cast %107 : vector<1x3x1x64xf32> to vector<3x64xf32>
    %c0_54 = arith.constant 0 : index
    %c0_55 = arith.constant 0 : index
    %c2_56 = arith.constant 2 : index
    %c0_57 = arith.constant 0 : index
    %109 = vector.load %arg2[%c0_54, %c0_55, %c2_56, %c0_57] : memref<1x2x4x64xf32, #tpu.memory_space<vmem>>, vector<1x2x1x64xf32>
    %110 = vector.shape_cast %109 : vector<1x2x1x64xf32> to vector<2x64xf32>
    %cst_58 = arith.constant 3.14159274 : f32
    %111 = vector.broadcast %cst_58 : f32 to vector<3x64xf32>
    %112 = arith.addf %108, %111 : vector<3x64xf32>
    %cst_59 = arith.constant 2.86478901 : f32
    %113 = vector.broadcast %cst_59 : f32 to vector<3x64xf32>
    %114 = arith.mulf %112, %113 : vector<3x64xf32>
    %115 = math.floor %114 : vector<3x64xf32>
    %cst_60 = arith.constant 0.000000e+00 : f32
    %cst_61 = arith.constant 1.700000e+01 : f32
    %116 = vector.broadcast %cst_60 : f32 to vector<3x64xf32>
    %117 = arith.maximumf %116, %115 : vector<3x64xf32>
    %118 = vector.broadcast %cst_61 : f32 to vector<3x64xf32>
    %119 = arith.minimumf %118, %117 : vector<3x64xf32>
    %cst_62 = arith.constant dense<0.000000e+00> : vector<54x64xf32>
    %120 = tpu.matmul %12, %119, %cst_62 {dimension_numbers = #tpu.dot_dimension_numbers<[1], [0], [0], [1], [0, 0, 1, 1], [], []>} : vector<54x3xf32>, vector<3x64xf32>, vector<54x64xf32> -> vector<54x64xf32>
    %121 = vector.broadcast %20 : vector<54x1xf32> to vector<54x64xf32>
    %122 = arith.subf %120, %121 : vector<54x64xf32>
    %123 = math.absf %122 : vector<54x64xf32>
    %cst_63 = arith.constant 5.000000e-01 : f32
    %124 = vector.broadcast %cst_63 : f32 to vector<54x64xf32>
    %125 = arith.cmpf olt, %123, %124 : vector<54x64xf32>
    %126 = arith.extui %125 : vector<54x64xi1> to vector<54x64xi32>
    %127 = arith.sitofp %126 : vector<54x64xi32> to vector<54x64xf32>
    %cst_64 = arith.constant dense<0.000000e+00> : vector<2x54xf32>
    %128 = tpu.matmul %110, %127, %cst_64 {dimension_numbers = #tpu.dot_dimension_numbers<[1], [1], [0], [0], [0, 0, 1, 0], [], []>} : vector<2x64xf32>, vector<54x64xf32>, vector<2x54xf32> -> vector<2x54xf32>
    %cst_65 = arith.constant dense<0.000000e+00> : vector<1x54xf32>
    %129 = tpu.matmul %21, %127, %cst_65 {dimension_numbers = #tpu.dot_dimension_numbers<[1], [1], [0], [0], [0, 0, 1, 0], [], []>} : vector<1x64xf32>, vector<54x64xf32>, vector<1x54xf32> -> vector<1x54xf32>
    %cst_66 = arith.constant 9.99999971E-10 : f32
    %130 = vector.broadcast %cst_66 : f32 to vector<1x54xf32>
    %131 = arith.addf %129, %130 : vector<1x54xf32>
    %132 = vector.broadcast %131 : vector<1x54xf32> to vector<2x54xf32>
    %133 = arith.divf %128, %132 : vector<2x54xf32>
    %cst_67 = arith.constant dense<0.000000e+00> : vector<2x3xf32>
    %134 = tpu.matmul %133, %12, %cst_67 {dimension_numbers = #tpu.dot_dimension_numbers<[1], [0], [0], [1], [0, 0, 1, 1], [], []>} : vector<2x54xf32>, vector<54x3xf32>, vector<2x3xf32> -> vector<2x3xf32>
    %cst_68 = arith.constant dense<0.000000e+00> : vector<2x54xf32>
    %135 = tpu.matmul %134, %12, %cst_68 {dimension_numbers = #tpu.dot_dimension_numbers<[1], [1], [0], [0], [0, 0, 1, 0], [], []>} : vector<2x3xf32>, vector<54x3xf32>, vector<2x54xf32> -> vector<2x54xf32>
    %cst_69 = arith.constant 9.99999971E-10 : f32
    %136 = vector.broadcast %cst_69 : f32 to vector<2x54xf32>
    %137 = arith.addf %135, %136 : vector<2x54xf32>
    %138 = arith.divf %133, %137 : vector<2x54xf32>
    %cst_70 = arith.constant 9.99999971E-10 : f32
    %139 = vector.broadcast %cst_70 : f32 to vector<2x54xf32>
    %140 = arith.addf %138, %139 : vector<2x54xf32>
    %141 = math.log %140 : vector<2x54xf32>
    %142 = arith.mulf %138, %141 : vector<2x54xf32>
    %cst_71 = arith.constant dense<0.000000e+00> : vector<3x2xf32>
    %143 = tpu.matmul %12, %142, %cst_71 {dimension_numbers = #tpu.dot_dimension_numbers<[0], [1], [1], [0], [0, 1, 1, 0], [], []>} : vector<54x3xf32>, vector<2x54xf32>, vector<3x2xf32> -> vector<3x2xf32>
    %cst_72 = arith.constant 2.8903718 : f32
    %144 = vector.broadcast %cst_72 : f32 to vector<3x2xf32>
    %145 = arith.addf %144, %143 : vector<3x2xf32>
    %cst_73 = arith.constant 2.8903718 : f32
    %146 = vector.broadcast %cst_73 : f32 to vector<3x2xf32>
    %147 = arith.divf %145, %146 : vector<3x2xf32>
    %148 = arith.addf %106, %147 : vector<3x2xf32>
    %c0_74 = arith.constant 0 : index
    %c0_75 = arith.constant 0 : index
    %c3 = arith.constant 3 : index
    %c0_76 = arith.constant 0 : index
    %149 = vector.load %arg1[%c0_74, %c0_75, %c3, %c0_76] : memref<1x3x4x64xf32, #tpu.memory_space<vmem>>, vector<1x3x1x64xf32>
    %150 = vector.shape_cast %149 : vector<1x3x1x64xf32> to vector<3x64xf32>
    %c0_77 = arith.constant 0 : index
    %c0_78 = arith.constant 0 : index
    %c3_79 = arith.constant 3 : index
    %c0_80 = arith.constant 0 : index
    %151 = vector.load %arg2[%c0_77, %c0_78, %c3_79, %c0_80] : memref<1x2x4x64xf32, #tpu.memory_space<vmem>>, vector<1x2x1x64xf32>
    %152 = vector.shape_cast %151 : vector<1x2x1x64xf32> to vector<2x64xf32>
    %cst_81 = arith.constant 3.14159274 : f32
    %153 = vector.broadcast %cst_81 : f32 to vector<3x64xf32>
    %154 = arith.addf %150, %153 : vector<3x64xf32>
    %cst_82 = arith.constant 2.86478901 : f32
    %155 = vector.broadcast %cst_82 : f32 to vector<3x64xf32>
    %156 = arith.mulf %154, %155 : vector<3x64xf32>
    %157 = math.floor %156 : vector<3x64xf32>
    %cst_83 = arith.constant 0.000000e+00 : f32
    %cst_84 = arith.constant 1.700000e+01 : f32
    %158 = vector.broadcast %cst_83 : f32 to vector<3x64xf32>
    %159 = arith.maximumf %158, %157 : vector<3x64xf32>
    %160 = vector.broadcast %cst_84 : f32 to vector<3x64xf32>
    %161 = arith.minimumf %160, %159 : vector<3x64xf32>
    %cst_85 = arith.constant dense<0.000000e+00> : vector<54x64xf32>
    %162 = tpu.matmul %12, %161, %cst_85 {dimension_numbers = #tpu.dot_dimension_numbers<[1], [0], [0], [1], [0, 0, 1, 1], [], []>} : vector<54x3xf32>, vector<3x64xf32>, vector<54x64xf32> -> vector<54x64xf32>
    %163 = vector.broadcast %20 : vector<54x1xf32> to vector<54x64xf32>
    %164 = arith.subf %162, %163 : vector<54x64xf32>
    %165 = math.absf %164 : vector<54x64xf32>
    %cst_86 = arith.constant 5.000000e-01 : f32
    %166 = vector.broadcast %cst_86 : f32 to vector<54x64xf32>
    %167 = arith.cmpf olt, %165, %166 : vector<54x64xf32>
    %168 = arith.extui %167 : vector<54x64xi1> to vector<54x64xi32>
    %169 = arith.sitofp %168 : vector<54x64xi32> to vector<54x64xf32>
    %cst_87 = arith.constant dense<0.000000e+00> : vector<2x54xf32>
    %170 = tpu.matmul %152, %169, %cst_87 {dimension_numbers = #tpu.dot_dimension_numbers<[1], [1], [0], [0], [0, 0, 1, 0], [], []>} : vector<2x64xf32>, vector<54x64xf32>, vector<2x54xf32> -> vector<2x54xf32>
    %cst_88 = arith.constant dense<0.000000e+00> : vector<1x54xf32>
    %171 = tpu.matmul %21, %169, %cst_88 {dimension_numbers = #tpu.dot_dimension_numbers<[1], [1], [0], [0], [0, 0, 1, 0], [], []>} : vector<1x64xf32>, vector<54x64xf32>, vector<1x54xf32> -> vector<1x54xf32>
    %cst_89 = arith.constant 9.99999971E-10 : f32
    %172 = vector.broadcast %cst_89 : f32 to vector<1x54xf32>
    %173 = arith.addf %171, %172 : vector<1x54xf32>
    %174 = vector.broadcast %173 : vector<1x54xf32> to vector<2x54xf32>
    %175 = arith.divf %170, %174 : vector<2x54xf32>
    %cst_90 = arith.constant dense<0.000000e+00> : vector<2x3xf32>
    %176 = tpu.matmul %175, %12, %cst_90 {dimension_numbers = #tpu.dot_dimension_numbers<[1], [0], [0], [1], [0, 0, 1, 1], [], []>} : vector<2x54xf32>, vector<54x3xf32>, vector<2x3xf32> -> vector<2x3xf32>
    %cst_91 = arith.constant dense<0.000000e+00> : vector<2x54xf32>
    %177 = tpu.matmul %176, %12, %cst_91 {dimension_numbers = #tpu.dot_dimension_numbers<[1], [1], [0], [0], [0, 0, 1, 0], [], []>} : vector<2x3xf32>, vector<54x3xf32>, vector<2x54xf32> -> vector<2x54xf32>
    %cst_92 = arith.constant 9.99999971E-10 : f32
    %178 = vector.broadcast %cst_92 : f32 to vector<2x54xf32>
    %179 = arith.addf %177, %178 : vector<2x54xf32>
    %180 = arith.divf %175, %179 : vector<2x54xf32>
    %cst_93 = arith.constant 9.99999971E-10 : f32
    %181 = vector.broadcast %cst_93 : f32 to vector<2x54xf32>
    %182 = arith.addf %180, %181 : vector<2x54xf32>
    %183 = math.log %182 : vector<2x54xf32>
    %184 = arith.mulf %180, %183 : vector<2x54xf32>
    %cst_94 = arith.constant dense<0.000000e+00> : vector<3x2xf32>
    %185 = tpu.matmul %12, %184, %cst_94 {dimension_numbers = #tpu.dot_dimension_numbers<[0], [1], [1], [0], [0, 1, 1, 0], [], []>} : vector<54x3xf32>, vector<2x54xf32>, vector<3x2xf32> -> vector<3x2xf32>
    %cst_95 = arith.constant 2.8903718 : f32
    %186 = vector.broadcast %cst_95 : f32 to vector<3x2xf32>
    %187 = arith.addf %186, %185 : vector<3x2xf32>
    %cst_96 = arith.constant 2.8903718 : f32
    %188 = vector.broadcast %cst_96 : f32 to vector<3x2xf32>
    %189 = arith.divf %187, %188 : vector<3x2xf32>
    %190 = arith.addf %148, %189 : vector<3x2xf32>
    %cst_97 = arith.constant 2.500000e-01 : f32
    %191 = vector.broadcast %cst_97 : f32 to vector<3x2xf32>
    %192 = arith.mulf %190, %191 : vector<3x2xf32>
    %193 = arith.cmpf one, %192, %192 : vector<3x2xf32>
    %cst_98 = arith.constant 0.000000e+00 : f32
    %194 = vector.broadcast %cst_98 : f32 to vector<3x2xf32>
    %195 = arith.select %193, %194, %192 : vector<3x2xi1>, vector<3x2xf32>
    %c0_99 = arith.constant 0 : index
    %c0_100 = arith.constant 0 : index
    %c0_101 = arith.constant 0 : index
    %196 = vector.load %arg3[%c0_99, %c0_100, %c0_101] : memref<1x3x2xf32, #tpu.memory_space<vmem>>, vector<1x3x2xf32>
    %197 = vector.shape_cast %196 : vector<1x3x2xf32> to vector<3x2xf32>
    %198 = vector.shape_cast %195 : vector<3x2xf32> to vector<1x3x2xf32>
    tpu.vector_store %arg3[%c0_99, %c0_100, %c0_101], %198 {strides = array<i32>} : memref<1x3x2xf32, #tpu.memory_space<vmem>>, vector<1x3x2xf32>,
    return
  }
  func.func @transform_0(%arg0: i32) -> (i32, i32, i32, i32) {
    %c0_i32 = arith.constant 0 : i32
    %c0_i32_0 = arith.constant 0 : i32
    %c0_i32_1 = arith.constant 0 : i32
    %c0_i32_2 = arith.constant 0 : i32
    return %arg0, %c0_i32, %c0_i32_0, %c0_i32_1 : i32, i32, i32, i32
  }
  func.func @transform_1(%arg0: i32) -> (i32, i32, i32, i32) {
    %c0_i32 = arith.constant 0 : i32
    %c0_i32_0 = arith.constant 0 : i32
    %c0_i32_1 = arith.constant 0 : i32
    %c0_i32_2 = arith.constant 0 : i32
    return %arg0, %c0_i32, %c0_i32_0, %c0_i32_1 : i32, i32, i32, i32
  }
  func.func @transform_2(%arg0: i32) -> (i32, i32, i32) {
    %c0_i32 = arith.constant 0 : i32
    %c0_i32_0 = arith.constant 0 : i32
    %c0_i32_1 = arith.constant 0 : i32
    return %arg0, %c0_i32, %c0_i32_0 : i32, i32, i32
  }
}

</mosaic_0001>

<llo_original>
// kernel: tpu_custom_call.1
$region0: #{tpu_custom_call.1}
  #allocation0 [shape = 'u32[]', space=smem, size = 0x4, offset = 0x4, fixed_abs, tag = 'smem constant byte address 0x4 - core index']
  #allocation1 [shape = 'u32[144,128]{1,0:T(1,128)}', space=vmem, size = 0x12000, scoped, tag = 'internal scratch']
  %s0 = inlined_call_operand.hbm [shape: f32[8,3,4,64], index: 0, kind: input, shape index: {}]
  %s1 = inlined_call_operand.hbm [shape: f32[8,2,4,64], index: 1, kind: input, shape index: {}]
  %s2 = inlined_call_operand.vmem [shape: f32[8,3,2], index: 2, kind: output, shape index: {}]
  %s3 = sld [smem:[#allocation0]]
  $region49: #{tpu_custom_call.1} parent=0
    _
  %s5 = ssub.s32 1, %s3
  %s6 = scalar_select 0, %s5, %s3
  $region1: #{tpu_custom_call.1} parent=0
    #allocation2 [shape = 'u8[12288]{0}', space=vmem, size = 0x3000, scoped, tag = 'input window, operand 0']
    #allocation3 [shape = 's32[2]{0}', space=sflag, size = 0x8, scoped, tag = 'scoped memory for tpu_custom_call.1']
    #allocation4 [shape = 'u8[8192]{0}', space=vmem, size = 0x2000, scoped, tag = 'input window, operand 1']
    #allocation5 [shape = 's32[2]{0}', space=sflag, size = 0x8, scoped, tag = 'scoped memory for tpu_custom_call.1']
    %7 = vsyncpa [#allocation3], 0
    %s8 = scalar_lea.sflag [#allocation3], 1
    %9 = vsyncpa %s8, 0
    %10 = vsyncpa [#allocation5], 0
    %s11 = scalar_lea.sflag [#allocation5], 1
    %12 = vsyncpa %s11, 0
    loop: start=0, step=1, limit=10
    $region2: #{tpu_custom_call.1} parent=1 // loop_pre_header
      _
    $region3: #{tpu_custom_call.1} parent=1 // loop_header
      %s14 = sphi 0, %s18
      %p15 = scmp.ge.s32.totalorder %s14, 10
      %s24 = sphi 0, %s26
      %s27 = sphi 0, %s24
      %s28 = sphi 0, %s27
      %s44 = sphi 0, %s28
      %s50 = sphi 0, %s52
      %s53 = sphi 0, %s50
      %s54 = sphi 0, %s53
      %s70 = sphi 0, %s54
      %s76 = sphi 0, %s78
      %s79 = sphi 0, %s76
      %s80 = sphi 0, %s79
      %s96 = sphi 0, %s80
    $region4: #{tpu_custom_call.1} parent=1 // loop_header_branch
      %17 = sbr.rel (%p15) target = $region8
    $region5: #{tpu_custom_call.1} parent=1 // loop_body
      %s19 = ssub.s32 %s14, 1
      %s20 = ssub.s32 %s14, 2
      %s21 = sadd.s32 %s14, 1
      %s22 = ssub.s32 %s14, %s21
      %p23 = scmp.eq.s32.totalorder %s22, 0
      %s25 = sadd.s32 %s24, 1
      %s26 = scalar_select %p23, %s24, %s25
      %p29 = pneg %p23
      %p30 = scmp.eq.s32.totalorder %s14, 7
      %p31 = por %p29, %p30
      %p32 = scmp.ne.s32.totalorder %s24, %s27
      %p33 = scmp.eq.s32.totalorder %s14, 0
      %p34 = por %p32, %p33
      %p35 = scmp.ne.s32.totalorder %s24, %s27
      %p36 = scmp.eq.s32.totalorder %s19, 7
      %p37 = por %p35, %p36
      %p38 = scmp.ne.s32.totalorder %s27, %s28
      %p39 = scmp.eq.s32.totalorder %s19, 0
      %p40 = por %p38, %p39
      %p41 = scmp.ne.s32.totalorder %s27, %s28
      %p42 = scmp.eq.s32.totalorder %s20, 7
      %p43 = por %p41, %p42
      %p45 = scmp.ne.s32.totalorder %s28, %s44
      %p46 = scmp.eq.s32.totalorder %s20, 0
      %p47 = por %p45, %p46
      %s48 = ssub.s32 %s14, %s21
      %p49 = scmp.eq.s32.totalorder %s48, 0
      %s51 = sadd.s32 %s50, 1
      %s52 = scalar_select %p49, %s50, %s51
      %p55 = pneg %p49
      %p56 = scmp.eq.s32.totalorder %s14, 7
      %p57 = por %p55, %p56
      %p58 = scmp.ne.s32.totalorder %s50, %s53
      %p59 = scmp.eq.s32.totalorder %s14, 0
      %p60 = por %p58, %p59
      %p61 = scmp.ne.s32.totalorder %s50, %s53
      %p62 = scmp.eq.s32.totalorder %s19, 7
      %p63 = por %p61, %p62
      %p64 = scmp.ne.s32.totalorder %s53, %s54
      %p65 = scmp.eq.s32.totalorder %s19, 0
      %p66 = por %p64, %p65
      %p67 = scmp.ne.s32.totalorder %s53, %s54
      %p68 = scmp.eq.s32.totalorder %s20, 7
      %p69 = por %p67, %p68
      %p71 = scmp.ne.s32.totalorder %s54, %s70
      %p72 = scmp.eq.s32.totalorder %s20, 0
      %p73 = por %p71, %p72
      %s74 = ssub.s32 %s14, %s21
      %p75 = scmp.eq.s32.totalorder %s74, 0
      %s77 = sadd.s32 %s76, 1
      %s78 = scalar_select %p75, %s76, %s77
      %p81 = pneg %p75
      %p82 = scmp.eq.s32.totalorder %s14, 7
      %p83 = por %p81, %p82
      %p84 = scmp.ne.s32.totalorder %s76, %s79
      %p85 = scmp.eq.s32.totalorder %s14, 0
      %p86 = por %p84, %p85
      %p87 = scmp.ne.s32.totalorder %s76, %s79
      %p88 = scmp.eq.s32.totalorder %s19, 7
      %p89 = por %p87, %p88
      %p90 = scmp.ne.s32.totalorder %s79, %s80
      %p91 = scmp.eq.s32.totalorder %s19, 0
      %p92 = por %p90, %p91
      %p93 = scmp.ne.s32.totalorder %s79, %s80
      %p94 = scmp.eq.s32.totalorder %s20, 7
      %p95 = por %p93, %p94
      %p97 = scmp.ne.s32.totalorder %s80, %s96
      %p98 = scmp.eq.s32.totalorder %s20, 0
      %p99 = por %p97, %p98
      %p100 = scmp.le.s32.totalorder 1, %s14
      %p101 = scmp.lt.s32.totalorder %s14, 9
      %p102 = pnand %p100, %p101
      %p103 = pneg %p102
      // Predicated region
      $region9: #{tpu_custom_call.1} parent=5 // pred_check
        _
      $region10: #{tpu_custom_call.1} parent=5 // pred_check_branch
        %105 = sbr.rel (%p102) target = $region12
      $region11: #{tpu_custom_call.1} parent=5 // pred_region
        %s106 = ssub.s32 %s14, 1
      $region12: #{tpu_custom_call.1} parent=5 // pred_fallthru
        _
      %p107 = scmp.lt.s32.totalorder %s14, 8
      // Predicated region
      $region13: #{tpu_custom_call.1} parent=5 // pred_check
        %p108 = pneg %p107
      $region14: #{tpu_custom_call.1} parent=5 // pred_check_branch
        %110 = sbr.rel (%p108) target = $region16
      $region15: #{tpu_custom_call.1} parent=5 // pred_region
        // Predicated region
        $region17: #{tpu_custom_call.1} parent=15 // pred_check
          %p111 = pneg %p34
        $region18: #{tpu_custom_call.1} parent=15 // pred_check_branch
          %113 = sbr.rel (%p111) target = $region20
        $region19: #{tpu_custom_call.1} parent=15 // pred_region
          %s114 = sand.u32 %s24, 1
          %s115 = scalar_lea.sflag [#allocation3], %s114
          %s116 = sand.u32 %s24, 1
          %s117 = smul.addr %s116, 12
          %s118 = scalar_lea.vmem [#allocation2], %s117
          %s120 = ssub.s32 192, 192
          %121 = vsyncadd %s115, %s120
          %s122 = smul.addr %s14, 3
          %s123 = smul.addr %s122, 64
          %s124 = scalar_lea.hbm %s0, %s123
          %s125 = sshll.u32 %s118, 4
          %s126 = int_to_ptr.vmem [resolvable:$true] %s125
          %131 = dma.hbm_to_vmem [thread:$0]  %s124, 192, %s126, %s115, 64, 64, 4
        $region20: #{tpu_custom_call.1} parent=15 // pred_fallthru
          _
        // Predicated region
        $region21: #{tpu_custom_call.1} parent=15 // pred_check
          %p132 = pneg %p60
        $region22: #{tpu_custom_call.1} parent=15 // pred_check_branch
          %134 = sbr.rel (%p132) target = $region24
        $region23: #{tpu_custom_call.1} parent=15 // pred_region
          %s135 = sand.u32 %s50, 1
          %s136 = scalar_lea.sflag [#allocation5], %s135
          %s137 = sand.u32 %s50, 1
          %s138 = smul.addr %s137, 8
          %s139 = scalar_lea.vmem [#allocation4], %s138
          %s141 = ssub.s32 128, 128
          %142 = vsyncadd %s136, %s141
          %s143 = smul.addr %s14, 2
          %s144 = smul.addr %s143, 64
          %s145 = scalar_lea.hbm %s1, %s144
          %s146 = sshll.u32 %s139, 4
          %s147 = int_to_ptr.vmem [resolvable:$true] %s146
          %152 = dma.hbm_to_vmem [thread:$0]  %s145, 128, %s147, %s136, 64, 64, 4
        $region24: #{tpu_custom_call.1} parent=15 // pred_fallthru
          _
      $region16: #{tpu_custom_call.1} parent=5 // pred_fallthru
        _
      %p153 = scmp.le.s32.totalorder 1, %s14
      %p154 = scmp.lt.s32.totalorder %s14, 9
      %p155 = pnand %p153, %p154
      %p156 = pneg %p155
      // Predicated region
      $region25: #{tpu_custom_call.1} parent=5 // pred_check
        _
      $region26: #{tpu_custom_call.1} parent=5 // pred_check_branch
        %158 = sbr.rel (%p155) target = $region28
      $region27: #{tpu_custom_call.1} parent=5 // pred_region
        %s159 = ssub.s32 %s14, 1
        %s160 = sand.u32 %s27, 1
        %s161 = scalar_lea.sflag [#allocation3], %s160
        %s162 = sand.u32 %s27, 1
        %s163 = smul.addr %s162, 12
        %s164 = scalar_lea.vmem [#allocation2], %s163
        // Predicated region
        $region29: #{tpu_custom_call.1} parent=27 // pred_check
          %p165 = pneg %p40
        $region30: #{tpu_custom_call.1} parent=27 // pred_check_branch
          %167 = sbr.rel (%p165) target = $region32
        $region31: #{tpu_custom_call.1} parent=27 // pred_region
          %168 = dma.done %s161, 192
        $region32: #{tpu_custom_call.1} parent=27 // pred_fallthru
          _
        %s169 = sand.u32 %s53, 1
        %s170 = scalar_lea.sflag [#allocation5], %s169
        %s171 = sand.u32 %s53, 1
        %s172 = smul.addr %s171, 8
        %s173 = scalar_lea.vmem [#allocation4], %s172
        // Predicated region
        $region33: #{tpu_custom_call.1} parent=27 // pred_check
          %p174 = pneg %p66
        $region34: #{tpu_custom_call.1} parent=27 // pred_check_branch
          %176 = sbr.rel (%p174) target = $region36
        $region35: #{tpu_custom_call.1} parent=27 // pred_region
          %177 = dma.done %s170, 128
        $region36: #{tpu_custom_call.1} parent=27 // pred_fallthru
          _
        %s178 = sand.u32 %s27, 1
        %s179 = scalar_lea.sflag [#allocation3], %s178
        %s180 = sand.u32 %s27, 1
        %s181 = smul.addr %s180, 12
        %s182 = scalar_lea.vmem [#allocation2], %s181
        %p183 = pneg %p40
        %p184 = pneg %p37
        %s185 = sand.u32 %s53, 1
        %s186 = scalar_lea.sflag [#allocation5], %s185
        %s187 = sand.u32 %s53, 1
        %s188 = smul.addr %s187, 8
        %s189 = scalar_lea.vmem [#allocation4], %s188
        %p190 = pneg %p66
        %p191 = pneg %p63
        %p192 = pneg %p92
        %p193 = pneg %p89
        %p194 = scmp.lt.s32.totalorder %s19, 7
        %s195 = scalar_select %p194, %s19, 7
        %s196 = smul.addr %s195, 4
        %s197 = scalar_lea.vmem %s2, %s196
        %p198 = scmp.lt.s32.totalorder %s19, 7
        %s199 = scalar_select %p198, %s19, 7
        %s200 = smul.addr %s199, 4
        %s201 = scalar_lea.vmem %s2, %s200
        %v202 = vlaneseq
        %v203 = vshrl.u32 %v202, 7
        %v204 = vadd.s32 %v203, 8
        %v205 = vadd.s32 %v203, 16
        %v206 = vadd.s32 %v203, 24
        %v207 = vadd.s32 %v203, 32
        %v208 = vadd.s32 %v203, 40
        %v209 = vadd.s32 %v203, 48
        %v210 = vlaneseq
        %v211 = vand.u32 %v210, 127
        %v212 = vmul.u32 %v211, 18
        %vm213 = vcmp.ge.s32.totalorder %v203, %v212
        %vm214 = vcmp.ge.s32.totalorder %v204, %v212
        %vm215 = vcmp.ge.s32.totalorder %v205, %v212
        %vm216 = vcmp.ge.s32.totalorder %v206, %v212
        %vm217 = vcmp.ge.s32.totalorder %v207, %v212
        %vm218 = vcmp.ge.s32.totalorder %v208, %v212
        %vm219 = vcmp.ge.s32.totalorder %v209, %v212
        %v220 = vadd.s32 %v211, 1
        %v221 = vmul.u32 %v220, 18
        %vm222 = vcmp.lt.s32.totalorder %v203, %v221
        %vm223 = vcmp.lt.s32.totalorder %v204, %v221
        %vm224 = vcmp.lt.s32.totalorder %v205, %v221
        %vm225 = vcmp.lt.s32.totalorder %v206, %v221
        %vm226 = vcmp.lt.s32.totalorder %v207, %v221
        %vm227 = vcmp.lt.s32.totalorder %v208, %v221
        %vm228 = vcmp.lt.s32.totalorder %v209, %v221
        %vm229 = vmand %vm213, %vm222
        %vm230 = vmand %vm214, %vm223
        %vm231 = vmand %vm215, %vm224
        %vm232 = vmand %vm216, %vm225
        %vm233 = vmand %vm217, %vm226
        %vm234 = vmand %vm218, %vm227
        %vm235 = vmand %vm219, %vm228
        %v236 = vsel %vm229, 1, 0
        %v237 = vsel %vm230, 1, 0
        %v238 = vsel %vm231, 1, 0
        %v239 = vsel %vm232, 1, 0
        %v240 = vsel %vm233, 1, 0
        %v241 = vsel %vm234, 1, 0
        %v242 = vsel %vm235, 1, 0
        %v243 = vcvt.s32.f32 %v236
        %v244 = vcvt.s32.f32 %v237
        %v245 = vcvt.s32.f32 %v238
        %v246 = vcvt.s32.f32 %v239
        %v247 = vcvt.s32.f32 %v240
        %v248 = vcvt.s32.f32 %v241
        %v249 = vcvt.s32.f32 %v242
        %v250 = vsub.s32 %v203, %v212
        %v251 = vsub.s32 %v204, %v212
        %v252 = vsub.s32 %v205, %v212
        %v253 = vsub.s32 %v206, %v212
        %v254 = vsub.s32 %v207, %v212
        %v255 = vsub.s32 %v208, %v212
        %v256 = vsub.s32 %v209, %v212
        %v257 = vcvt.s32.f32 %v250
        %v258 = vcvt.s32.f32 %v251
        %v259 = vcvt.s32.f32 %v252
        %v260 = vcvt.s32.f32 %v253
        %v261 = vcvt.s32.f32 %v254
        %v262 = vcvt.s32.f32 %v255
        %v263 = vcvt.s32.f32 %v256
        %v264 = vsel %vm229, %v257, 0.0
        %v265 = vsel %vm230, %v258, 0.0
        %v266 = vsel %vm231, %v259, 0.0
        %v267 = vsel %vm232, %v260, 0.0
        %v268 = vsel %vm233, %v261, 0.0
        %v269 = vsel %vm234, %v262, 0.0
        %v270 = vsel %vm235, %v263, 0.0
        %vm271 = vcmask 23552
        %v272 = vsel %vm271, %v264, 0.0
        %273 = vadd.xlane.f32.xlu0 %v272
        %v274 = vpop.xlane.xlu0 %273
        %v275 = vsel %vm271, %v265, 0.0
        %276 = vadd.xlane.f32.xlu0 %v275
        %v277 = vpop.xlane.xlu0 %276
        %v278 = vsel %vm271, %v266, 0.0
        %279 = vadd.xlane.f32.xlu0 %v278
        %v280 = vpop.xlane.xlu0 %279
        %v281 = vsel %vm271, %v267, 0.0
        %282 = vadd.xlane.f32.xlu0 %v281
        %v283 = vpop.xlane.xlu0 %282
        %v284 = vsel %vm271, %v268, 0.0
        %285 = vadd.xlane.f32.xlu0 %v284
        %v286 = vpop.xlane.xlu0 %285
        %v287 = vsel %vm271, %v269, 0.0
        %288 = vadd.xlane.f32.xlu0 %v287
        %v289 = vpop.xlane.xlu0 %288
        %vm290 = vcmask 21504
        %v291 = vsel %vm290, %v270, 0.0
        %292 = vadd.xlane.f32.xlu0 %v291
        %v293 = vpop.xlane.xlu0 %292
        %v294 = vld [vmem:[%s164] sm:$0x1]
        %v295 = vld [vmem:[%s164 + $0x4] sm:$0x1]
        %v296 = vld [vmem:[%s164 + $0x8] sm:$0x1]
        %v297 = vld [vmem:[%s173] sm:$0x1]
        %v298 = vld [vmem:[%s173 + $0x4] sm:$0x1]
        %v299 = vadd.f32 %v294, 3.1415927
        %v300 = vadd.f32 %v295, 3.1415927
        %v301 = vadd.f32 %v296, 3.1415927
        %v302 = vmul.f32 %v299, 2.864789
        %v303 = vmul.f32 %v300, 2.864789
        %v304 = vmul.f32 %v301, 2.864789
        %v305 = vfloor.f32 %v302
        %v306 = vfloor.f32 %v303
        %v307 = vfloor.f32 %v304
        %v308 = vmax.f32 %v305, 0.0
        %v309 = vmax.f32 %v306, 0.0
        %v310 = vmax.f32 %v307, 0.0
        %v311 = vmin.f32 %v308, 17.0
        %v312 = vmin.f32 %v309, 17.0
        %v313 = vmin.f32 %v310, 17.0
        %v317 = vrot.slane %v312, 7
        %vm318 = vcmask 1041409
        %v319 = vsel %vm318, %v317, %v311
        %v320 = vrot.slane %v313, 6
        %vm321 = vcmask 1042434
        %v322 = vsel %vm321, %v320, %v319
        %v324 = vsel %vm271, %v243, 0
        %v327 = vsel %vm271, %v244, 0
        %v330 = vsel %vm271, %v245, 0
        %v333 = vsel %vm271, %v246, 0
        %v336 = vsel %vm271, %v247, 0
        %v339 = vsel %vm271, %v248, 0
        %v342 = vsel %vm271, %v249, 0
        %vm344 = vcmask 1042432
        %v345 = vsel %vm344, %v322, 0
        %347 = vmatprep.subr.mxu0 0.0
        %348 = vmatpush1.msra.mxu0 %v345
        %349 = vmatprep.subr.mxu0 0.0
        %350 = vmatpush1.msra.mxu0 0.0
        %351 = vmatprep.subr.mxu0 0.0
        %352 = vmatpush1.msra.mxu0 0.0
        %353 = vmatprep.subr.mxu0 0.0
        %354 = vmatpush1.msra.mxu0 0.0
        %355 = vmatprep.subr.mxu0 0.0
        %356 = vmatpush1.msra.mxu0 0.0
        %357 = vmatprep.subr.mxu0 0.0
        %358 = vmatpush1.msra.mxu0 0.0
        %359 = vmatprep.subr.mxu0 0.0
        %360 = vmatpush1.msra.mxu0 0.0
        %361 = vmatprep.subr.mxu0 0.0
        %362 = vmatpush1.msra.mxu0 0.0
        %363 = vmatprep.subr.mxu0 0.0
        %364 = vmatpush1.msra.mxu0 0.0
        %365 = vmatprep.subr.mxu0 0.0
        %366 = vmatpush1.msra.mxu0 0.0
        %367 = vmatprep.subr.mxu0 0.0
        %368 = vmatpush1.msra.mxu0 0.0
        %369 = vmatprep.subr.mxu0 0.0
        %370 = vmatpush1.msra.mxu0 0.0
        %371 = vmatprep.subr.mxu0 0.0
        %372 = vmatpush1.msra.mxu0 0.0
        %373 = vmatprep.subr.mxu0 0.0
        %374 = vmatpush1.msra.mxu0 0.0
        %375 = vmatprep.subr.mxu0 0.0
        %376 = vmatpush1.msra.mxu0 0.0
        %377 = vmatprep.subr.mxu0 0.0
        %378 = vmatpush1.msra.mxu0 0.0
        %379 = vmatprep.subr.mxu0 0.0
        %380 = vmatpush1.msra.mxu0 0.0
        %381 = vmatprep.subr.mxu0 0.0
        %382 = vmatpush1.msra.mxu0 0.0
        %383 = vmatprep.subr.mxu0 0.0
        %384 = vmatpush1.msra.mxu0 0.0
        %385 = vmatprep.subr.mxu0 0.0
        %386 = vmatpush1.msra.mxu0 0.0
        %387 = vmatprep.subr.mxu0 0.0
        %388 = vmatpush1.msra.mxu0 0.0
        %389 = vmatprep.subr.mxu0 0.0
        %390 = vmatpush1.msra.mxu0 0.0
        %391 = vmatprep.subr.mxu0 0.0
        %392 = vmatpush1.msra.mxu0 0.0
        %393 = vmatprep.subr.mxu0 0.0
        %394 = vmatpush1.msra.mxu0 0.0
        %395 = vmatprep.subr.mxu0 0.0
        %396 = vmatpush1.msra.mxu0 0.0
        %397 = vmatprep.subr.mxu0 0.0
        %398 = vmatpush1.msra.mxu0 0.0
        %399 = vmatprep.subr.mxu0 0.0
        %400 = vmatpush1.msra.mxu0 0.0
        %401 = vmatprep.subr.mxu0 0.0
        %402 = vmatpush1.msra.mxu0 0.0
        %403 = vmatprep.subr.mxu0 0.0
        %404 = vmatpush1.msra.mxu0 0.0
        %405 = vmatprep.subr.mxu0 0.0
        %406 = vmatpush1.msra.mxu0 0.0
        %407 = vmatprep.subr.mxu0 0.0
        %408 = vmatpush1.msra.mxu0 0.0
        %409 = vmatprep.subr.mxu0 0.0
        %410 = vmatpush1.msra.mxu0 0.0
        %411 = vmatprep.mubr.f32.mxu0 0.0
        %412 = vmatmul.mubr.f32.gmra.mrb[0].mxu0 %v324
        %v413 = vpop.f32.mrb[0].mxu0
        %v414 = vadd.f32 0.0, %v413
        %v415 = vpop.f32.mrb[0].mxu0
        %416 = vmatprep.mubr.f32.mxu0 0.0
        %417 = vmatmul.mubr.f32.gmra.mrb[0].mxu0 %v327
        %v418 = vpop.f32.mrb[0].mxu0
        %v419 = vadd.f32 0.0, %v418
        %v420 = vpop.f32.mrb[0].mxu0
        %421 = vmatprep.mubr.f32.mxu0 0.0
        %422 = vmatmul.mubr.f32.gmra.mrb[0].mxu0 %v330
        %v423 = vpop.f32.mrb[0].mxu0
        %v424 = vadd.f32 0.0, %v423
        %v425 = vpop.f32.mrb[0].mxu0
        %426 = vmatprep.mubr.f32.mxu0 0.0
        %427 = vmatmul.mubr.f32.gmra.mrb[0].mxu0 %v333
        %v428 = vpop.f32.mrb[0].mxu0
        %v429 = vadd.f32 0.0, %v428
        %v430 = vpop.f32.mrb[0].mxu0
        %431 = vmatprep.mubr.f32.mxu0 0.0
        %432 = vmatmul.mubr.f32.gmra.mrb[0].mxu0 %v336
        %v433 = vpop.f32.mrb[0].mxu0
        %v434 = vadd.f32 0.0, %v433
        %v435 = vpop.f32.mrb[0].mxu0
        %436 = vmatprep.mubr.f32.mxu0 0.0
        %437 = vmatmul.mubr.f32.gmra.mrb[0].mxu0 %v339
        %v438 = vpop.f32.mrb[0].mxu0
        %v439 = vadd.f32 0.0, %v438
        %v440 = vpop.f32.mrb[0].mxu0
        %441 = vmatprep.mubr.f32.mxu0 0.0
        %442 = vmatmul.mubr.f32.gmra.mrb[0].mxu0 %v342
        %v443 = vpop.f32.mrb[0].mxu0
        %v444 = vadd.f32 0.0, %v443
        %v445 = vpop.f32.mrb[0].mxu0
        %446 = vdwg.mxu0
        %v447 = vsub.f32 %v414, %v274
        %v448 = vsub.f32 %v419, %v277
        %v449 = vsub.f32 %v424, %v280
        %v450 = vsub.f32 %v429, %v283
        %v451 = vsub.f32 %v434, %v286
        %v452 = vsub.f32 %v439, %v289
        %v453 = vsub.f32 %v444, %v293
        %v454 = vand.u32 2147483647, %v447
        %v455 = vand.u32 2147483647, %v448
        %v456 = vand.u32 2147483647, %v449
        %v457 = vand.u32 2147483647, %v450
        %v458 = vand.u32 2147483647, %v451
        %v459 = vand.u32 2147483647, %v452
        %v460 = vand.u32 2147483647, %v453
        %vm461 = vcmp.lt.f32.partialorder %v454, 0.5
        %vm462 = vcmp.lt.f32.partialorder %v455, 0.5
        %vm463 = vcmp.lt.f32.partialorder %v456, 0.5
        %vm464 = vcmp.lt.f32.partialorder %v457, 0.5
        %vm465 = vcmp.lt.f32.partialorder %v458, 0.5
        %vm466 = vcmp.lt.f32.partialorder %v459, 0.5
        %vm467 = vcmp.lt.f32.partialorder %v460, 0.5
        %v468 = vsel %vm461, 1, 0
        %v469 = vsel %vm462, 1, 0
        %v470 = vsel %vm463, 1, 0
        %v471 = vsel %vm464, 1, 0
        %v472 = vsel %vm465, 1, 0
        %v473 = vsel %vm466, 1, 0
        %v474 = vsel %vm467, 1, 0
        %v475 = vcvt.s32.f32 %v468
        %v476 = vcvt.s32.f32 %v469
        %v477 = vcvt.s32.f32 %v470
        %v478 = vcvt.s32.f32 %v471
        %v479 = vcvt.s32.f32 %v472
        %v480 = vcvt.s32.f32 %v473
        %v481 = vcvt.s32.f32 %v474
        %v484 = vrot.slane %v298, 7
        %v485 = vsel %vm318, %v484, %v297
        %vm486 = vcmask 523264
        %v487 = vsel %vm486, %v485, 0
        %v490 = vsel %vm486, %v475, 0
        %v493 = vsel %vm486, %v476, 0
        %v496 = vsel %vm486, %v477, 0
        %v499 = vsel %vm486, %v478, 0
        %v502 = vsel %vm486, %v479, 0
        %v505 = vsel %vm486, %v480, 0
        %v508 = vsel %vm486, %v481, 0
        %510 = vmatprep.subr.mxu0 0.0
        %511 = vmatpush1.xpose.msra.mxu0 %v490
        %512 = vmatprep.subr.mxu0 0.0
        %513 = vmatpush1.xpose.msra.mxu0 %v493
        %514 = vmatprep.subr.mxu0 0.0
        %515 = vmatpush1.xpose.msra.mxu0 %v496
        %516 = vmatprep.subr.mxu0 0.0
        %517 = vmatpush1.xpose.msra.mxu0 %v499
        %518 = vmatprep.subr.mxu0 0.0
        %519 = vmatpush1.xpose.msra.mxu0 %v502
        %520 = vmatprep.subr.mxu0 0.0
        %521 = vmatpush1.xpose.msra.mxu0 %v505
        %522 = vmatprep.subr.mxu0 0.0
        %523 = vmatpush1.xpose.msra.mxu0 %v508
        %524 = vmatprep.subr.mxu0 0.0
        %525 = vmatpush1.xpose.msra.mxu0 0.0
        %526 = vmatprep.subr.mxu0 0.0
        %527 = vmatpush1.xpose.msra.mxu0 0.0
        %528 = vmatprep.subr.mxu0 0.0
        %529 = vmatpush1.xpose.msra.mxu0 0.0
        %530 = vmatprep.subr.mxu0 0.0
        %531 = vmatpush1.xpose.msra.mxu0 0.0
        %532 = vmatprep.subr.mxu0 0.0
        %533 = vmatpush1.xpose.msra.mxu0 0.0
        %534 = vmatprep.subr.mxu0 0.0
        %535 = vmatpush1.xpose.msra.mxu0 0.0
        %536 = vmatprep.subr.mxu0 0.0
        %537 = vmatpush1.xpose.msra.mxu0 0.0
        %538 = vmatprep.subr.mxu0 0.0
        %539 = vmatpush1.xpose.msra.mxu0 0.0
        %540 = vmatprep.subr.mxu0 0.0
        %541 = vmatpush1.xpose.msra.mxu0 0.0
        %542 = vmatprep.subr.mxu0 0.0
        %543 = vmatpush1.xpose.msra.mxu0 0.0
        %544 = vmatprep.subr.mxu0 0.0
        %545 = vmatpush1.xpose.msra.mxu0 0.0
        %546 = vmatprep.subr.mxu0 0.0
        %547 = vmatpush1.xpose.msra.mxu0 0.0
        %548 = vmatprep.subr.mxu0 0.0
        %549 = vmatpush1.xpose.msra.mxu0 0.0
        %550 = vmatprep.subr.mxu0 0.0
        %551 = vmatpush1.xpose.msra.mxu0 0.0
        %552 = vmatprep.subr.mxu0 0.0
        %553 = vmatpush1.xpose.msra.mxu0 0.0
        %554 = vmatprep.subr.mxu0 0.0
        %555 = vmatpush1.xpose.msra.mxu0 0.0
        %556 = vmatprep.subr.mxu0 0.0
        %557 = vmatpush1.xpose.msra.mxu0 0.0
        %558 = vmatprep.subr.mxu0 0.0
        %559 = vmatpush1.xpose.msra.mxu0 0.0
        %560 = vmatprep.subr.mxu0 0.0
        %561 = vmatpush1.xpose.msra.mxu0 0.0
        %562 = vmatprep.subr.mxu0 0.0
        %563 = vmatpush1.xpose.msra.mxu0 0.0
        %564 = vmatprep.subr.mxu0 0.0
        %565 = vmatpush1.xpose.msra.mxu0 0.0
        %566 = vmatprep.subr.mxu0 0.0
        %567 = vmatpush1.xpose.msra.mxu0 0.0
        %568 = vmatprep.subr.mxu0 0.0
        %569 = vmatpush1.xpose.msra.mxu0 0.0
        %570 = vmatprep.subr.mxu0 0.0
        %571 = vmatpush1.xpose.msra.mxu0 0.0
        %572 = vmatprep.subr.mxu0 0.0
        %573 = vmatpush1.xpose.msra.mxu0 0.0
        %574 = vmatprep.mubr.f32.mxu0 0.0
        %575 = vmatmul.mubr.f32.gmra.mrb[0].mxu0 %v487
        %v576 = vpop.f32.mrb[0].mxu0
        %v577 = vadd.f32 0.0, %v576
        %v578 = vpop.f32.mrb[0].mxu0
        %579 = vdwg.mxu0
        %v581 = vsel %vm486, 1.0, 0
        %583 = vmatprep.subr.mxu0 0.0
        %584 = vmatpush1.xpose.msra.mxu0 %v490
        %585 = vmatprep.subr.mxu0 0.0
        %586 = vmatpush1.xpose.msra.mxu0 %v493
        %587 = vmatprep.subr.mxu0 0.0
        %588 = vmatpush1.xpose.msra.mxu0 %v496
        %589 = vmatprep.subr.mxu0 0.0
        %590 = vmatpush1.xpose.msra.mxu0 %v499
        %591 = vmatprep.subr.mxu0 0.0
        %592 = vmatpush1.xpose.msra.mxu0 %v502
        %593 = vmatprep.subr.mxu0 0.0
        %594 = vmatpush1.xpose.msra.mxu0 %v505
        %595 = vmatprep.subr.mxu0 0.0
        %596 = vmatpush1.xpose.msra.mxu0 %v508
        %597 = vmatprep.subr.mxu0 0.0
        %598 = vmatpush1.xpose.msra.mxu0 0.0
        %599 = vmatprep.subr.mxu0 0.0
        %600 = vmatpush1.xpose.msra.mxu0 0.0
        %601 = vmatprep.subr.mxu0 0.0
        %602 = vmatpush1.xpose.msra.mxu0 0.0
        %603 = vmatprep.subr.mxu0 0.0
        %604 = vmatpush1.xpose.msra.mxu0 0.0
        %605 = vmatprep.subr.mxu0 0.0
        %606 = vmatpush1.xpose.msra.mxu0 0.0
        %607 = vmatprep.subr.mxu0 0.0
        %608 = vmatpush1.xpose.msra.mxu0 0.0
        %609 = vmatprep.subr.mxu0 0.0
        %610 = vmatpush1.xpose.msra.mxu0 0.0
        %611 = vmatprep.subr.mxu0 0.0
        %612 = vmatpush1.xpose.msra.mxu0 0.0
        %613 = vmatprep.subr.mxu0 0.0
        %614 = vmatpush1.xpose.msra.mxu0 0.0
        %615 = vmatprep.subr.mxu0 0.0
        %616 = vmatpush1.xpose.msra.mxu0 0.0
        %617 = vmatprep.subr.mxu0 0.0
        %618 = vmatpush1.xpose.msra.mxu0 0.0
        %619 = vmatprep.subr.mxu0 0.0
        %620 = vmatpush1.xpose.msra.mxu0 0.0
        %621 = vmatprep.subr.mxu0 0.0
        %622 = vmatpush1.xpose.msra.mxu0 0.0
        %623 = vmatprep.subr.mxu0 0.0
        %624 = vmatpush1.xpose.msra.mxu0 0.0
        %625 = vmatprep.subr.mxu0 0.0
        %626 = vmatpush1.xpose.msra.mxu0 0.0
        %627 = vmatprep.subr.mxu0 0.0
        %628 = vmatpush1.xpose.msra.mxu0 0.0
        %629 = vmatprep.subr.mxu0 0.0
        %630 = vmatpush1.xpose.msra.mxu0 0.0
        %631 = vmatprep.subr.mxu0 0.0
        %632 = vmatpush1.xpose.msra.mxu0 0.0
        %633 = vmatprep.subr.mxu0 0.0
        %634 = vmatpush1.xpose.msra.mxu0 0.0
        %635 = vmatprep.subr.mxu0 0.0
        %636 = vmatpush1.xpose.msra.mxu0 0.0
        %637 = vmatprep.subr.mxu0 0.0
        %638 = vmatpush1.xpose.msra.mxu0 0.0
        %639 = vmatprep.subr.mxu0 0.0
        %640 = vmatpush1.xpose.msra.mxu0 0.0
        %641 = vmatprep.subr.mxu0 0.0
        %642 = vmatpush1.xpose.msra.mxu0 0.0
        %643 = vmatprep.subr.mxu0 0.0
        %644 = vmatpush1.xpose.msra.mxu0 0.0
        %645 = vmatprep.subr.mxu0 0.0
        %646 = vmatpush1.xpose.msra.mxu0 0.0
        %647 = vmatprep.mubr.f32.mxu0 0.0
        %648 = vmatmul.mubr.f32.gmra.mrb[0].mxu0 %v581
        %v649 = vpop.f32.mrb[0].mxu0
        %v650 = vadd.f32 1e-09, %v649
        %v651 = vpop.f32.mrb[0].mxu0
        %652 = vdwg.mxu0
        %v653 = vlaneseq
        %v654 = vshrl.u32 %v653, 7
        %v655 = vsub.s32 0, %v654
        %v656 = vrot.slane %v650, %v655
        %v657 = vrcp.pop %v656
        %v658 = vmul.f32 %v577, %v657
        %vm659 = vcmask 441344
        %v661 = vsel %vm659, %v658, 0
        %vm663 = vcmask 1045504
        %v664 = vsel %vm663, %v249, 0
        %666 = vmatprep.subr.mxu0 0.0
        %667 = vmatpush1.msra.mxu0 %v243
        %668 = vmatprep.subr.mxu0 0.0
        %669 = vmatpush1.msra.mxu0 %v244
        %670 = vmatprep.subr.mxu0 0.0
        %671 = vmatpush1.msra.mxu0 %v245
        %672 = vmatprep.subr.mxu0 0.0
        %673 = vmatpush1.msra.mxu0 %v246
        %674 = vmatprep.subr.mxu0 0.0
        %675 = vmatpush1.msra.mxu0 %v247
        %676 = vmatprep.subr.mxu0 0.0
        %677 = vmatpush1.msra.mxu0 %v248
        %678 = vmatprep.subr.mxu0 0.0
        %679 = vmatpush1.msra.mxu0 %v664
        %680 = vmatprep.subr.mxu0 0.0
        %681 = vmatpush1.msra.mxu0 0.0
        %682 = vmatprep.subr.mxu0 0.0
        %683 = vmatpush1.msra.mxu0 0.0
        %684 = vmatprep.subr.mxu0 0.0
        %685 = vmatpush1.msra.mxu0 0.0
        %686 = vmatprep.subr.mxu0 0.0
        %687 = vmatpush1.msra.mxu0 0.0
        %688 = vmatprep.subr.mxu0 0.0
        %689 = vmatpush1.msra.mxu0 0.0
        %690 = vmatprep.subr.mxu0 0.0
        %691 = vmatpush1.msra.mxu0 0.0
        %692 = vmatprep.subr.mxu0 0.0
        %693 = vmatpush1.msra.mxu0 0.0
        %694 = vmatprep.subr.mxu0 0.0
        %695 = vmatpush1.msra.mxu0 0.0
        %696 = vmatprep.subr.mxu0 0.0
        %697 = vmatpush1.msra.mxu0 0.0
        %698 = vmatprep.subr.mxu0 0.0
        %699 = vmatpush1.msra.mxu0 0.0
        %700 = vmatprep.subr.mxu0 0.0
        %701 = vmatpush1.msra.mxu0 0.0
        %702 = vmatprep.subr.mxu0 0.0
        %703 = vmatpush1.msra.mxu0 0.0
        %704 = vmatprep.subr.mxu0 0.0
        %705 = vmatpush1.msra.mxu0 0.0
        %706 = vmatprep.subr.mxu0 0.0
        %707 = vmatpush1.msra.mxu0 0.0
        %708 = vmatprep.subr.mxu0 0.0
        %709 = vmatpush1.msra.mxu0 0.0
        %710 = vmatprep.subr.mxu0 0.0
        %711 = vmatpush1.msra.mxu0 0.0
        %712 = vmatprep.subr.mxu0 0.0
        %713 = vmatpush1.msra.mxu0 0.0
        %714 = vmatprep.subr.mxu0 0.0
        %715 = vmatpush1.msra.mxu0 0.0
        %716 = vmatprep.subr.mxu0 0.0
        %717 = vmatpush1.msra.mxu0 0.0
        %718 = vmatprep.subr.mxu0 0.0
        %719 = vmatpush1.msra.mxu0 0.0
        %720 = vmatprep.subr.mxu0 0.0
        %721 = vmatpush1.msra.mxu0 0.0
        %722 = vmatprep.subr.mxu0 0.0
        %723 = vmatpush1.msra.mxu0 0.0
        %724 = vmatprep.subr.mxu0 0.0
        %725 = vmatpush1.msra.mxu0 0.0
        %726 = vmatprep.subr.mxu0 0.0
        %727 = vmatpush1.msra.mxu0 0.0
        %728 = vmatprep.subr.mxu0 0.0
        %729 = vmatpush1.msra.mxu0 0.0
        %730 = vmatprep.mubr.f32.mxu0 0.0
        %731 = vmatmul.mubr.f32.gmra.mrb[0].mxu0 %v661
        %v732 = vpop.f32.mrb[0].mxu0
        %v733 = vadd.f32 0.0, %v732
        %v734 = vpop.f32.mrb[0].mxu0
        %735 = vdwg.mxu0
        %v737 = vsel %vm271, %v733, 0
        %739 = vmatprep.subr.mxu0 0.0
        %740 = vmatpush1.xpose.msra.mxu0 %v324
        %741 = vmatprep.subr.mxu0 0.0
        %742 = vmatpush1.xpose.msra.mxu0 %v327
        %743 = vmatprep.subr.mxu0 0.0
        %744 = vmatpush1.xpose.msra.mxu0 %v330
        %745 = vmatprep.subr.mxu0 0.0
        %746 = vmatpush1.xpose.msra.mxu0 %v333
        %747 = vmatprep.subr.mxu0 0.0
        %748 = vmatpush1.xpose.msra.mxu0 %v336
        %749 = vmatprep.subr.mxu0 0.0
        %750 = vmatpush1.xpose.msra.mxu0 %v339
        %751 = vmatprep.subr.mxu0 0.0
        %752 = vmatpush1.xpose.msra.mxu0 %v342
        %753 = vmatprep.subr.mxu0 0.0
        %754 = vmatpush1.xpose.msra.mxu0 0.0
        %755 = vmatprep.subr.mxu0 0.0
        %756 = vmatpush1.xpose.msra.mxu0 0.0
        %757 = vmatprep.subr.mxu0 0.0
        %758 = vmatpush1.xpose.msra.mxu0 0.0
        %759 = vmatprep.subr.mxu0 0.0
        %760 = vmatpush1.xpose.msra.mxu0 0.0
        %761 = vmatprep.subr.mxu0 0.0
        %762 = vmatpush1.xpose.msra.mxu0 0.0
        %763 = vmatprep.subr.mxu0 0.0
        %764 = vmatpush1.xpose.msra.mxu0 0.0
        %765 = vmatprep.subr.mxu0 0.0
        %766 = vmatpush1.xpose.msra.mxu0 0.0
        %767 = vmatprep.subr.mxu0 0.0
        %768 = vmatpush1.xpose.msra.mxu0 0.0
        %769 = vmatprep.subr.mxu0 0.0
        %770 = vmatpush1.xpose.msra.mxu0 0.0
        %771 = vmatprep.subr.mxu0 0.0
        %772 = vmatpush1.xpose.msra.mxu0 0.0
        %773 = vmatprep.subr.mxu0 0.0
        %774 = vmatpush1.xpose.msra.mxu0 0.0
        %775 = vmatprep.subr.mxu0 0.0
        %776 = vmatpush1.xpose.msra.mxu0 0.0
        %777 = vmatprep.subr.mxu0 0.0
        %778 = vmatpush1.xpose.msra.mxu0 0.0
        %779 = vmatprep.subr.mxu0 0.0
        %780 = vmatpush1.xpose.msra.mxu0 0.0
        %781 = vmatprep.subr.mxu0 0.0
        %782 = vmatpush1.xpose.msra.mxu0 0.0
        %783 = vmatprep.subr.mxu0 0.0
        %784 = vmatpush1.xpose.msra.mxu0 0.0
        %785 = vmatprep.subr.mxu0 0.0
        %786 = vmatpush1.xpose.msra.mxu0 0.0
        %787 = vmatprep.subr.mxu0 0.0
        %788 = vmatpush1.xpose.msra.mxu0 0.0
        %789 = vmatprep.subr.mxu0 0.0
        %790 = vmatpush1.xpose.msra.mxu0 0.0
        %791 = vmatprep.subr.mxu0 0.0
        %792 = vmatpush1.xpose.msra.mxu0 0.0
        %793 = vmatprep.subr.mxu0 0.0
        %794 = vmatpush1.xpose.msra.mxu0 0.0
        %795 = vmatprep.subr.mxu0 0.0
        %796 = vmatpush1.xpose.msra.mxu0 0.0
        %797 = vmatprep.subr.mxu0 0.0
        %798 = vmatpush1.xpose.msra.mxu0 0.0
        %799 = vmatprep.subr.mxu0 0.0
        %800 = vmatpush1.xpose.msra.mxu0 0.0
        %801 = vmatprep.subr.mxu0 0.0
        %802 = vmatpush1.xpose.msra.mxu0 0.0
        %803 = vmatprep.mubr.f32.mxu0 0.0
        %804 = vmatmul.mubr.f32.gmra.mrb[0].mxu0 %v737
        %v805 = vpop.f32.mrb[0].mxu0
        %v806 = vadd.f32 1e-09, %v805
        %v807 = vpop.f32.mrb[0].mxu0
        %808 = vdwg.mxu0
        %v809 = vrcp.pop %v806
        %v810 = vmul.f32 %v658, %v809
        %v811 = vadd.f32 %v810, 1e-09
        %v812 = vlog2.pop %v811
        %v813 = vmul.f32 %v812, 0.6931472
        %v814 = vmul.f32 %v810, %v813
        %815 = vxpose.xlu0.b32.start [1/16] %v243, 128
        %816 = vxpose.xlu0.b32.cont [2/16] %v244, 128
        %817 = vxpose.xlu0.b32.cont [3/16] %v245, 128
        %818 = vxpose.xlu0.b32.cont [4/16] %v246, 128
        %819 = vxpose.xlu0.b32.cont [5/16] %v247, 128
        %820 = vxpose.xlu0.b32.cont [6/16] %v248, 128
        %821 = vxpose.xlu0.b32.cont [7/16] %v249, 128
        %822 = vxpose.xlu0.b32.cont [8/16] 0.0, 128
        %823 = vxpose.xlu0.b32.cont [9/16] 0.0, 128
        %824 = vxpose.xlu0.b32.cont [10/16] 0.0, 128
        %825 = vxpose.xlu0.b32.cont [11/16] 0.0, 128
        %826 = vxpose.xlu0.b32.cont [12/16] 0.0, 128
        %827 = vxpose.xlu0.b32.cont [13/16] 0.0, 128
        %828 = vxpose.xlu0.b32.cont [14/16] 0.0, 128
        %829 = vxpose.xlu0.b32.cont [15/16] 0.0, 128
        %830 = vxpose.xlu0.b32.end [16/16] 0.0, 128
        %v831 = vpop.trf.xlu0
        %v832 = vpop.trf.xlu0
        %v833 = vpop.trf.xlu0
        %v834 = vpop.trf.xlu0
        %v835 = vpop.trf.xlu0
        %v836 = vpop.trf.xlu0
        %v837 = vpop.trf.xlu0
        %v838 = vpop.trf.xlu0
        %v839 = vpop.trf.xlu0
        %v840 = vpop.trf.xlu0
        %v841 = vpop.trf.xlu0
        %v842 = vpop.trf.xlu0
        %v843 = vpop.trf.xlu0
        %v844 = vpop.trf.xlu0
        %v845 = vpop.trf.xlu0
        %v846 = vpop.trf.xlu0
        %v848 = vsel %vm659, %v831, 0
        %v851 = vsel %vm659, %v814, 0
        %853 = vmatprep.subr.mxu0 0.0
        %854 = vmatpush1.xpose.msra.mxu0 %v851
        %855 = vmatprep.subr.mxu0 0.0
        %856 = vmatpush1.xpose.msra.mxu0 0.0
        %857 = vmatprep.subr.mxu0 0.0
        %858 = vmatpush1.xpose.msra.mxu0 0.0
        %859 = vmatprep.subr.mxu0 0.0
        %860 = vmatpush1.xpose.msra.mxu0 0.0
        %861 = vmatprep.subr.mxu0 0.0
        %862 = vmatpush1.xpose.msra.mxu0 0.0
        %863 = vmatprep.subr.mxu0 0.0
        %864 = vmatpush1.xpose.msra.mxu0 0.0
        %865 = vmatprep.subr.mxu0 0.0
        %866 = vmatpush1.xpose.msra.mxu0 0.0
        %867 = vmatprep.subr.mxu0 0.0
        %868 = vmatpush1.xpose.msra.mxu0 0.0
        %869 = vmatprep.subr.mxu0 0.0
        %870 = vmatpush1.xpose.msra.mxu0 0.0
        %871 = vmatprep.subr.mxu0 0.0
        %872 = vmatpush1.xpose.msra.mxu0 0.0
        %873 = vmatprep.subr.mxu0 0.0
        %874 = vmatpush1.xpose.msra.mxu0 0.0
        %875 = vmatprep.subr.mxu0 0.0
        %876 = vmatpush1.xpose.msra.mxu0 0.0
        %877 = vmatprep.subr.mxu0 0.0
        %878 = vmatpush1.xpose.msra.mxu0 0.0
        %879 = vmatprep.subr.mxu0 0.0
        %880 = vmatpush1.xpose.msra.mxu0 0.0
        %881 = vmatprep.subr.mxu0 0.0
        %882 = vmatpush1.xpose.msra.mxu0 0.0
        %883 = vmatprep.subr.mxu0 0.0
        %884 = vmatpush1.xpose.msra.mxu0 0.0
        %885 = vmatprep.subr.mxu0 0.0
        %886 = vmatpush1.xpose.msra.mxu0 0.0
        %887 = vmatprep.subr.mxu0 0.0
        %888 = vmatpush1.xpose.msra.mxu0 0.0
        %889 = vmatprep.subr.mxu0 0.0
        %890 = vmatpush1.xpose.msra.mxu0 0.0
        %891 = vmatprep.subr.mxu0 0.0
        %892 = vmatpush1.xpose.msra.mxu0 0.0
        %893 = vmatprep.subr.mxu0 0.0
        %894 = vmatpush1.xpose.msra.mxu0 0.0
        %895 = vmatprep.subr.mxu0 0.0
        %896 = vmatpush1.xpose.msra.mxu0 0.0
        %897 = vmatprep.subr.mxu0 0.0
        %898 = vmatpush1.xpose.msra.mxu0 0.0
        %899 = vmatprep.subr.mxu0 0.0
        %900 = vmatpush1.xpose.msra.mxu0 0.0
        %901 = vmatprep.subr.mxu0 0.0
        %902 = vmatpush1.xpose.msra.mxu0 0.0
        %903 = vmatprep.subr.mxu0 0.0
        %904 = vmatpush1.xpose.msra.mxu0 0.0
        %905 = vmatprep.subr.mxu0 0.0
        %906 = vmatpush1.xpose.msra.mxu0 0.0
        %907 = vmatprep.subr.mxu0 0.0
        %908 = vmatpush1.xpose.msra.mxu0 0.0
        %909 = vmatprep.subr.mxu0 0.0
        %910 = vmatpush1.xpose.msra.mxu0 0.0
        %911 = vmatprep.subr.mxu0 0.0
        %912 = vmatpush1.xpose.msra.mxu0 0.0
        %913 = vmatprep.subr.mxu0 0.0
        %914 = vmatpush1.xpose.msra.mxu0 0.0
        %915 = vmatprep.subr.mxu0 0.0
        %916 = vmatpush1.xpose.msra.mxu0 0.0
        %917 = vmatprep.mubr.f32.mxu0 0.0
        %918 = vmatmul.mubr.f32.gmra.mrb[0].mxu0 %v848
        %v919 = vpop.f32.mrb[0].mxu0
        %v920 = vadd.f32 2.8903718, %v919
        %v921 = vpop.f32.mrb[0].mxu0
        %922 = vdwg.mxu0
        %v923 = vrcp.pop 2.8903718
        %v924 = vmul.f32 %v920, %v923
        %v925 = vadd.f32 %v924, 0.0
        %v926 = vld [vmem:[%s164 + $0x1] sm:$0x1]
        %v927 = vld [vmem:[%s164 + $0x5] sm:$0x1]
        %v928 = vld [vmem:[%s164 + $0x9] sm:$0x1]
        %v929 = vld [vmem:[%s173 + $0x1] sm:$0x1]
        %v930 = vld [vmem:[%s173 + $0x5] sm:$0x1]
        %v931 = vadd.f32 %v926, 3.1415927
        %v932 = vadd.f32 %v927, 3.1415927
        %v933 = vadd.f32 %v928, 3.1415927
        %v934 = vmul.f32 %v931, 2.864789
        %v935 = vmul.f32 %v932, 2.864789
        %v936 = vmul.f32 %v933, 2.864789
        %v937 = vfloor.f32 %v934
        %v938 = vfloor.f32 %v935
        %v939 = vfloor.f32 %v936
        %v940 = vmax.f32 %v937, 0.0
        %v941 = vmax.f32 %v938, 0.0
        %v942 = vmax.f32 %v939, 0.0
        %v943 = vmin.f32 %v940, 17.0
        %v944 = vmin.f32 %v941, 17.0
        %v945 = vmin.f32 %v942, 17.0
        %v949 = vrot.slane %v944, 7
        %v950 = vsel %vm318, %v949, %v943
        %v951 = vrot.slane %v945, 6
        %v952 = vsel %vm321, %v951, %v950
        %v953 = vsel %vm344, %v952, 0
        %955 = vmatprep.subr.mxu0 0.0
        %956 = vmatpush1.msra.mxu0 %v953
        %957 = vmatprep.subr.mxu0 0.0
        %958 = vmatpush1.msra.mxu0 0.0
        %959 = vmatprep.subr.mxu0 0.0
        %960 = vmatpush1.msra.mxu0 0.0
        %961 = vmatprep.subr.mxu0 0.0
        %962 = vmatpush1.msra.mxu0 0.0
        %963 = vmatprep.subr.mxu0 0.0
        %964 = vmatpush1.msra.mxu0 0.0
        %965 = vmatprep.subr.mxu0 0.0
        %966 = vmatpush1.msra.mxu0 0.0
        %967 = vmatprep.subr.mxu0 0.0
        %968 = vmatpush1.msra.mxu0 0.0
        %969 = vmatprep.subr.mxu0 0.0
        %970 = vmatpush1.msra.mxu0 0.0
        %971 = vmatprep.subr.mxu0 0.0
        %972 = vmatpush1.msra.mxu0 0.0
        %973 = vmatprep.subr.mxu0 0.0
        %974 = vmatpush1.msra.mxu0 0.0
        %975 = vmatprep.subr.mxu0 0.0
        %976 = vmatpush1.msra.mxu0 0.0
        %977 = vmatprep.subr.mxu0 0.0
        %978 = vmatpush1.msra.mxu0 0.0
        %979 = vmatprep.subr.mxu0 0.0
        %980 = vmatpush1.msra.mxu0 0.0
        %981 = vmatprep.subr.mxu0 0.0
        %982 = vmatpush1.msra.mxu0 0.0
        %983 = vmatprep.subr.mxu0 0.0
        %984 = vmatpush1.msra.mxu0 0.0
        %985 = vmatprep.subr.mxu0 0.0
        %986 = vmatpush1.msra.mxu0 0.0
        %987 = vmatprep.subr.mxu0 0.0
        %988 = vmatpush1.msra.mxu0 0.0
        %989 = vmatprep.subr.mxu0 0.0
        %990 = vmatpush1.msra.mxu0 0.0
        %991 = vmatprep.subr.mxu0 0.0
        %992 = vmatpush1.msra.mxu0 0.0
        %993 = vmatprep.subr.mxu0 0.0
        %994 = vmatpush1.msra.mxu0 0.0
        %995 = vmatprep.subr.mxu0 0.0
        %996 = vmatpush1.msra.mxu0 0.0
        %997 = vmatprep.subr.mxu0 0.0
        %998 = vmatpush1.msra.mxu0 0.0
        %999 = vmatprep.subr.mxu0 0.0
        %1000 = vmatpush1.msra.mxu0 0.0
        %1001 = vmatprep.subr.mxu0 0.0
        %1002 = vmatpush1.msra.mxu0 0.0
        %1003 = vmatprep.subr.mxu0 0.0
        %1004 = vmatpush1.msra.mxu0 0.0
        %1005 = vmatprep.subr.mxu0 0.0
        %1006 = vmatpush1.msra.mxu0 0.0
        %1007 = vmatprep.subr.mxu0 0.0
        %1008 = vmatpush1.msra.mxu0 0.0
        %1009 = vmatprep.subr.mxu0 0.0
        %1010 = vmatpush1.msra.mxu0 0.0
        %1011 = vmatprep.subr.mxu0 0.0
        %1012 = vmatpush1.msra.mxu0 0.0
        %1013 = vmatprep.subr.mxu0 0.0
        %1014 = vmatpush1.msra.mxu0 0.0
        %1015 = vmatprep.subr.mxu0 0.0
        %1016 = vmatpush1.msra.mxu0 0.0
        %1017 = vmatprep.subr.mxu0 0.0
        %1018 = vmatpush1.msra.mxu0 0.0
        %1019 = vmatprep.mubr.f32.mxu0 0.0
        %1020 = vmatmul.mubr.f32.gmra.mrb[0].mxu0 %v324
        %v1021 = vpop.f32.mrb[0].mxu0
        %v1022 = vadd.f32 0.0, %v1021
        %v1023 = vpop.f32.mrb[0].mxu0
        %1024 = vmatprep.mubr.f32.mxu0 0.0
        %1025 = vmatmul.mubr.f32.gmra.mrb[0].mxu0 %v327
        %v1026 = vpop.f32.mrb[0].mxu0
        %v1027 = vadd.f32 0.0, %v1026
        %v1028 = vpop.f32.mrb[0].mxu0
        %1029 = vmatprep.mubr.f32.mxu0 0.0
        %1030 = vmatmul.mubr.f32.gmra.mrb[0].mxu0 %v330
        %v1031 = vpop.f32.mrb[0].mxu0
        %v1032 = vadd.f32 0.0, %v1031
        %v1033 = vpop.f32.mrb[0].mxu0
        %1034 = vmatprep.mubr.f32.mxu0 0.0
        %1035 = vmatmul.mubr.f32.gmra.mrb[0].mxu0 %v333
        %v1036 = vpop.f32.mrb[0].mxu0
        %v1037 = vadd.f32 0.0, %v1036
        %v1038 = vpop.f32.mrb[0].mxu0
        %1039 = vmatprep.mubr.f32.mxu0 0.0
        %1040 = vmatmul.mubr.f32.gmra.mrb[0].mxu0 %v336
        %v1041 = vpop.f32.mrb[0].mxu0
        %v1042 = vadd.f32 0.0, %v1041
        %v1043 = vpop.f32.mrb[0].mxu0
        %1044 = vmatprep.mubr.f32.mxu0 0.0
        %1045 = vmatmul.mubr.f32.gmra.mrb[0].mxu0 %v339
        %v1046 = vpop.f32.mrb[0].mxu0
        %v1047 = vadd.f32 0.0, %v1046
        %v1048 = vpop.f32.mrb[0].mxu0
        %1049 = vmatprep.mubr.f32.mxu0 0.0
        %1050 = vmatmul.mubr.f32.gmra.mrb[0].mxu0 %v342
        %v1051 = vpop.f32.mrb[0].mxu0
        %v1052 = vadd.f32 0.0, %v1051
        %v1053 = vpop.f32.mrb[0].mxu0
        %1054 = vdwg.mxu0
        %v1055 = vsub.f32 %v1022, %v274
        %v1056 = vsub.f32 %v1027, %v277
        %v1057 = vsub.f32 %v1032, %v280
        %v1058 = vsub.f32 %v1037, %v283
        %v1059 = vsub.f32 %v1042, %v286
        %v1060 = vsub.f32 %v1047, %v289
        %v1061 = vsub.f32 %v1052, %v293
        %v1062 = vand.u32 2147483647, %v1055
        %v1063 = vand.u32 2147483647, %v1056
        %v1064 = vand.u32 2147483647, %v1057
        %v1065 = vand.u32 2147483647, %v1058
        %v1066 = vand.u32 2147483647, %v1059
        %v1067 = vand.u32 2147483647, %v1060
        %v1068 = vand.u32 2147483647, %v1061
        %vm1069 = vcmp.lt.f32.partialorder %v1062, 0.5
        %vm1070 = vcmp.lt.f32.partialorder %v1063, 0.5
        %vm1071 = vcmp.lt.f32.partialorder %v1064, 0.5
        %vm1072 = vcmp.lt.f32.partialorder %v1065, 0.5
        %vm1073 = vcmp.lt.f32.partialorder %v1066, 0.5
        %vm1074 = vcmp.lt.f32.partialorder %v1067, 0.5
        %vm1075 = vcmp.lt.f32.partialorder %v1068, 0.5
        %v1076 = vsel %vm1069, 1, 0
        %v1077 = vsel %vm1070, 1, 0
        %v1078 = vsel %vm1071, 1, 0
        %v1079 = vsel %vm1072, 1, 0
        %v1080 = vsel %vm1073, 1, 0
        %v1081 = vsel %vm1074, 1, 0
        %v1082 = vsel %vm1075, 1, 0
        %v1083 = vcvt.s32.f32 %v1076
        %v1084 = vcvt.s32.f32 %v1077
        %v1085 = vcvt.s32.f32 %v1078
        %v1086 = vcvt.s32.f32 %v1079
        %v1087 = vcvt.s32.f32 %v1080
        %v1088 = vcvt.s32.f32 %v1081
        %v1089 = vcvt.s32.f32 %v1082
        %v1092 = vrot.slane %v930, 7
        %v1093 = vsel %vm318, %v1092, %v929
        %v1094 = vsel %vm486, %v1093, 0
        %v1097 = vsel %vm486, %v1083, 0
        %v1100 = vsel %vm486, %v1084, 0
        %v1103 = vsel %vm486, %v1085, 0
        %v1106 = vsel %vm486, %v1086, 0
        %v1109 = vsel %vm486, %v1087, 0
        %v1112 = vsel %vm486, %v1088, 0
        %v1115 = vsel %vm486, %v1089, 0
        %1117 = vmatprep.subr.mxu0 0.0
        %1118 = vmatpush1.xpose.msra.mxu0 %v1097
        %1119 = vmatprep.subr.mxu0 0.0
        %1120 = vmatpush1.xpose.msra.mxu0 %v1100
        %1121 = vmatprep.subr.mxu0 0.0
        %1122 = vmatpush1.xpose.msra.mxu0 %v1103
        %1123 = vmatprep.subr.mxu0 0.0
        %1124 = vmatpush1.xpose.msra.mxu0 %v1106
        %1125 = vmatprep.subr.mxu0 0.0
        %1126 = vmatpush1.xpose.msra.mxu0 %v1109
        %1127 = vmatprep.subr.mxu0 0.0
        %1128 = vmatpush1.xpose.msra.mxu0 %v1112
        %1129 = vmatprep.subr.mxu0 0.0
        %1130 = vmatpush1.xpose.msra.mxu0 %v1115
        %1131 = vmatprep.subr.mxu0 0.0
        %1132 = vmatpush1.xpose.msra.mxu0 0.0
        %1133 = vmatprep.subr.mxu0 0.0
        %1134 = vmatpush1.xpose.msra.mxu0 0.0
        %1135 = vmatprep.subr.mxu0 0.0
        %1136 = vmatpush1.xpose.msra.mxu0 0.0
        %1137 = vmatprep.subr.mxu0 0.0
        %1138 = vmatpush1.xpose.msra.mxu0 0.0
        %1139 = vmatprep.subr.mxu0 0.0
        %1140 = vmatpush1.xpose.msra.mxu0 0.0
        %1141 = vmatprep.subr.mxu0 0.0
        %1142 = vmatpush1.xpose.msra.mxu0 0.0
        %1143 = vmatprep.subr.mxu0 0.0
        %1144 = vmatpush1.xpose.msra.mxu0 0.0
        %1145 = vmatprep.subr.mxu0 0.0
        %1146 = vmatpush1.xpose.msra.mxu0 0.0
        %1147 = vmatprep.subr.mxu0 0.0
        %1148 = vmatpush1.xpose.msra.mxu0 0.0
        %1149 = vmatprep.subr.mxu0 0.0
        %1150 = vmatpush1.xpose.msra.mxu0 0.0
        %1151 = vmatprep.subr.mxu0 0.0
        %1152 = vmatpush1.xpose.msra.mxu0 0.0
        %1153 = vmatprep.subr.mxu0 0.0
        %1154 = vmatpush1.xpose.msra.mxu0 0.0
        %1155 = vmatprep.subr.mxu0 0.0
        %1156 = vmatpush1.xpose.msra.mxu0 0.0
        %1157 = vmatprep.subr.mxu0 0.0
        %1158 = vmatpush1.xpose.msra.mxu0 0.0
        %1159 = vmatprep.subr.mxu0 0.0
        %1160 = vmatpush1.xpose.msra.mxu0 0.0
        %1161 = vmatprep.subr.mxu0 0.0
        %1162 = vmatpush1.xpose.msra.mxu0 0.0
        %1163 = vmatprep.subr.mxu0 0.0
        %1164 = vmatpush1.xpose.msra.mxu0 0.0
        %1165 = vmatprep.subr.mxu0 0.0
        %1166 = vmatpush1.xpose.msra.mxu0 0.0
        %1167 = vmatprep.subr.mxu0 0.0
        %1168 = vmatpush1.xpose.msra.mxu0 0.0
        %1169 = vmatprep.subr.mxu0 0.0
        %1170 = vmatpush1.xpose.msra.mxu0 0.0
        %1171 = vmatprep.subr.mxu0 0.0
        %1172 = vmatpush1.xpose.msra.mxu0 0.0
        %1173 = vmatprep.subr.mxu0 0.0
        %1174 = vmatpush1.xpose.msra.mxu0 0.0
        %1175 = vmatprep.subr.mxu0 0.0
        %1176 = vmatpush1.xpose.msra.mxu0 0.0
        %1177 = vmatprep.subr.mxu0 0.0
        %1178 = vmatpush1.xpose.msra.mxu0 0.0
        %1179 = vmatprep.subr.mxu0 0.0
        %1180 = vmatpush1.xpose.msra.mxu0 0.0
        %1181 = vmatprep.mubr.f32.mxu0 0.0
        %1182 = vmatmul.mubr.f32.gmra.mrb[0].mxu0 %v1094
        %v1183 = vpop.f32.mrb[0].mxu0
        %v1184 = vadd.f32 0.0, %v1183
        %v1185 = vpop.f32.mrb[0].mxu0
        %1186 = vdwg.mxu0
        %1187 = vmatprep.subr.mxu0 0.0
        %1188 = vmatpush1.xpose.msra.mxu0 %v1097
        %1189 = vmatprep.subr.mxu0 0.0
        %1190 = vmatpush1.xpose.msra.mxu0 %v1100
        %1191 = vmatprep.subr.mxu0 0.0
        %1192 = vmatpush1.xpose.msra.mxu0 %v1103
        %1193 = vmatprep.subr.mxu0 0.0
        %1194 = vmatpush1.xpose.msra.mxu0 %v1106
        %1195 = vmatprep.subr.mxu0 0.0
        %1196 = vmatpush1.xpose.msra.mxu0 %v1109
        %1197 = vmatprep.subr.mxu0 0.0
        %1198 = vmatpush1.xpose.msra.mxu0 %v1112
        %1199 = vmatprep.subr.mxu0 0.0
        %1200 = vmatpush1.xpose.msra.mxu0 %v1115
        %1201 = vmatprep.subr.mxu0 0.0
        %1202 = vmatpush1.xpose.msra.mxu0 0.0
        %1203 = vmatprep.subr.mxu0 0.0
        %1204 = vmatpush1.xpose.msra.mxu0 0.0
        %1205 = vmatprep.subr.mxu0 0.0
        %1206 = vmatpush1.xpose.msra.mxu0 0.0
        %1207 = vmatprep.subr.mxu0 0.0
        %1208 = vmatpush1.xpose.msra.mxu0 0.0
        %1209 = vmatprep.subr.mxu0 0.0
        %1210 = vmatpush1.xpose.msra.mxu0 0.0
        %1211 = vmatprep.subr.mxu0 0.0
        %1212 = vmatpush1.xpose.msra.mxu0 0.0
        %1213 = vmatprep.subr.mxu0 0.0
        %1214 = vmatpush1.xpose.msra.mxu0 0.0
        %1215 = vmatprep.subr.mxu0 0.0
        %1216 = vmatpush1.xpose.msra.mxu0 0.0
        %1217 = vmatprep.subr.mxu0 0.0
        %1218 = vmatpush1.xpose.msra.mxu0 0.0
        %1219 = vmatprep.subr.mxu0 0.0
        %1220 = vmatpush1.xpose.msra.mxu0 0.0
        %1221 = vmatprep.subr.mxu0 0.0
        %1222 = vmatpush1.xpose.msra.mxu0 0.0
        %1223 = vmatprep.subr.mxu0 0.0
        %1224 = vmatpush1.xpose.msra.mxu0 0.0
        %1225 = vmatprep.subr.mxu0 0.0
        %1226 = vmatpush1.xpose.msra.mxu0 0.0
        %1227 = vmatprep.subr.mxu0 0.0
        %1228 = vmatpush1.xpose.msra.mxu0 0.0
        %1229 = vmatprep.subr.mxu0 0.0
        %1230 = vmatpush1.xpose.msra.mxu0 0.0
        %1231 = vmatprep.subr.mxu0 0.0
        %1232 = vmatpush1.xpose.msra.mxu0 0.0
        %1233 = vmatprep.subr.mxu0 0.0
        %1234 = vmatpush1.xpose.msra.mxu0 0.0
        %1235 = vmatprep.subr.mxu0 0.0
        %1236 = vmatpush1.xpose.msra.mxu0 0.0
        %1237 = vmatprep.subr.mxu0 0.0
        %1238 = vmatpush1.xpose.msra.mxu0 0.0
        %1239 = vmatprep.subr.mxu0 0.0
        %1240 = vmatpush1.xpose.msra.mxu0 0.0
        %1241 = vmatprep.subr.mxu0 0.0
        %1242 = vmatpush1.xpose.msra.mxu0 0.0
        %1243 = vmatprep.subr.mxu0 0.0
        %1244 = vmatpush1.xpose.msra.mxu0 0.0
        %1245 = vmatprep.subr.mxu0 0.0
        %1246 = vmatpush1.xpose.msra.mxu0 0.0
        %1247 = vmatprep.subr.mxu0 0.0
        %1248 = vmatpush1.xpose.msra.mxu0 0.0
        %1249 = vmatprep.subr.mxu0 0.0
        %1250 = vmatpush1.xpose.msra.mxu0 0.0
        %1251 = vmatprep.mubr.f32.mxu0 0.0
        %1252 = vmatmul.mubr.f32.gmra.mrb[0].mxu0 %v581
        %v1253 = vpop.f32.mrb[0].mxu0
        %v1254 = vadd.f32 1e-09, %v1253
        %v1255 = vpop.f32.mrb[0].mxu0
        %1256 = vdwg.mxu0
        %v1257 = vlaneseq
        %v1258 = vshrl.u32 %v1257, 7
        %v1259 = vsub.s32 0, %v1258
        %v1260 = vrot.slane %v1254, %v1259
        %v1261 = vrcp.pop %v1260
        %v1262 = vmul.f32 %v1184, %v1261
        %v1264 = vsel %vm659, %v1262, 0
        %1266 = vmatprep.subr.mxu0 0.0
        %1267 = vmatpush1.msra.mxu0 %v243
        %1268 = vmatprep.subr.mxu0 0.0
        %1269 = vmatpush1.msra.mxu0 %v244
        %1270 = vmatprep.subr.mxu0 0.0
        %1271 = vmatpush1.msra.mxu0 %v245
        %1272 = vmatprep.subr.mxu0 0.0
        %1273 = vmatpush1.msra.mxu0 %v246
        %1274 = vmatprep.subr.mxu0 0.0
        %1275 = vmatpush1.msra.mxu0 %v247
        %1276 = vmatprep.subr.mxu0 0.0
        %1277 = vmatpush1.msra.mxu0 %v248
        %1278 = vmatprep.subr.mxu0 0.0
        %1279 = vmatpush1.msra.mxu0 %v664
        %1280 = vmatprep.subr.mxu0 0.0
        %1281 = vmatpush1.msra.mxu0 0.0
        %1282 = vmatprep.subr.mxu0 0.0
        %1283 = vmatpush1.msra.mxu0 0.0
        %1284 = vmatprep.subr.mxu0 0.0
        %1285 = vmatpush1.msra.mxu0 0.0
        %1286 = vmatprep.subr.mxu0 0.0
        %1287 = vmatpush1.msra.mxu0 0.0
        %1288 = vmatprep.subr.mxu0 0.0
        %1289 = vmatpush1.msra.mxu0 0.0
        %1290 = vmatprep.subr.mxu0 0.0
        %1291 = vmatpush1.msra.mxu0 0.0
        %1292 = vmatprep.subr.mxu0 0.0
        %1293 = vmatpush1.msra.mxu0 0.0
        %1294 = vmatprep.subr.mxu0 0.0
        %1295 = vmatpush1.msra.mxu0 0.0
        %1296 = vmatprep.subr.mxu0 0.0
        %1297 = vmatpush1.msra.mxu0 0.0
        %1298 = vmatprep.subr.mxu0 0.0
        %1299 = vmatpush1.msra.mxu0 0.0
        %1300 = vmatprep.subr.mxu0 0.0
        %1301 = vmatpush1.msra.mxu0 0.0
        %1302 = vmatprep.subr.mxu0 0.0
        %1303 = vmatpush1.msra.mxu0 0.0
        %1304 = vmatprep.subr.mxu0 0.0
        %1305 = vmatpush1.msra.mxu0 0.0
        %1306 = vmatprep.subr.mxu0 0.0
        %1307 = vmatpush1.msra.mxu0 0.0
        %1308 = vmatprep.subr.mxu0 0.0
        %1309 = vmatpush1.msra.mxu0 0.0
        %1310 = vmatprep.subr.mxu0 0.0
        %1311 = vmatpush1.msra.mxu0 0.0
        %1312 = vmatprep.subr.mxu0 0.0
        %1313 = vmatpush1.msra.mxu0 0.0
        %1314 = vmatprep.subr.mxu0 0.0
        %1315 = vmatpush1.msra.mxu0 0.0
        %1316 = vmatprep.subr.mxu0 0.0
        %1317 = vmatpush1.msra.mxu0 0.0
        %1318 = vmatprep.subr.mxu0 0.0
        %1319 = vmatpush1.msra.mxu0 0.0
        %1320 = vmatprep.subr.mxu0 0.0
        %1321 = vmatpush1.msra.mxu0 0.0
        %1322 = vmatprep.subr.mxu0 0.0
        %1323 = vmatpush1.msra.mxu0 0.0
        %1324 = vmatprep.subr.mxu0 0.0
        %1325 = vmatpush1.msra.mxu0 0.0
        %1326 = vmatprep.subr.mxu0 0.0
        %1327 = vmatpush1.msra.mxu0 0.0
        %1328 = vmatprep.subr.mxu0 0.0
        %1329 = vmatpush1.msra.mxu0 0.0
        %1330 = vmatprep.mubr.f32.mxu0 0.0
        %1331 = vmatmul.mubr.f32.gmra.mrb[0].mxu0 %v1264
        %v1332 = vpop.f32.mrb[0].mxu0
        %v1333 = vadd.f32 0.0, %v1332
        %v1334 = vpop.f32.mrb[0].mxu0
        %1335 = vdwg.mxu0
        %v1337 = vsel %vm271, %v1333, 0
        %1339 = vmatprep.subr.mxu0 0.0
        %1340 = vmatpush1.xpose.msra.mxu0 %v324
        %1341 = vmatprep.subr.mxu0 0.0
        %1342 = vmatpush1.xpose.msra.mxu0 %v327
        %1343 = vmatprep.subr.mxu0 0.0
        %1344 = vmatpush1.xpose.msra.mxu0 %v330
        %1345 = vmatprep.subr.mxu0 0.0
        %1346 = vmatpush1.xpose.msra.mxu0 %v333
        %1347 = vmatprep.subr.mxu0 0.0
        %1348 = vmatpush1.xpose.msra.mxu0 %v336
        %1349 = vmatprep.subr.mxu0 0.0
        %1350 = vmatpush1.xpose.msra.mxu0 %v339
        %1351 = vmatprep.subr.mxu0 0.0
        %1352 = vmatpush1.xpose.msra.mxu0 %v342
        %1353 = vmatprep.subr.mxu0 0.0
        %1354 = vmatpush1.xpose.msra.mxu0 0.0
        %1355 = vmatprep.subr.mxu0 0.0
        %1356 = vmatpush1.xpose.msra.mxu0 0.0
        %1357 = vmatprep.subr.mxu0 0.0
        %1358 = vmatpush1.xpose.msra.mxu0 0.0
        %1359 = vmatprep.subr.mxu0 0.0
        %1360 = vmatpush1.xpose.msra.mxu0 0.0
        %1361 = vmatprep.subr.mxu0 0.0
        %1362 = vmatpush1.xpose.msra.mxu0 0.0
        %1363 = vmatprep.subr.mxu0 0.0
        %1364 = vmatpush1.xpose.msra.mxu0 0.0
        %1365 = vmatprep.subr.mxu0 0.0
        %1366 = vmatpush1.xpose.msra.mxu0 0.0
        %1367 = vmatprep.subr.mxu0 0.0
        %1368 = vmatpush1.xpose.msra.mxu0 0.0
        %1369 = vmatprep.subr.mxu0 0.0
        %1370 = vmatpush1.xpose.msra.mxu0 0.0
        %1371 = vmatprep.subr.mxu0 0.0
        %1372 = vmatpush1.xpose.msra.mxu0 0.0
        %1373 = vmatprep.subr.mxu0 0.0
        %1374 = vmatpush1.xpose.msra.mxu0 0.0
        %1375 = vmatprep.subr.mxu0 0.0
        %1376 = vmatpush1.xpose.msra.mxu0 0.0
        %1377 = vmatprep.subr.mxu0 0.0
        %1378 = vmatpush1.xpose.msra.mxu0 0.0
        %1379 = vmatprep.subr.mxu0 0.0
        %1380 = vmatpush1.xpose.msra.mxu0 0.0
        %1381 = vmatprep.subr.mxu0 0.0
        %1382 = vmatpush1.xpose.msra.mxu0 0.0
        %1383 = vmatprep.subr.mxu0 0.0
        %1384 = vmatpush1.xpose.msra.mxu0 0.0
        %1385 = vmatprep.subr.mxu0 0.0
        %1386 = vmatpush1.xpose.msra.mxu0 0.0
        %1387 = vmatprep.subr.mxu0 0.0
        %1388 = vmatpush1.xpose.msra.mxu0 0.0
        %1389 = vmatprep.subr.mxu0 0.0
        %1390 = vmatpush1.xpose.msra.mxu0 0.0
        %1391 = vmatprep.subr.mxu0 0.0
        %1392 = vmatpush1.xpose.msra.mxu0 0.0
        %1393 = vmatprep.subr.mxu0 0.0
        %1394 = vmatpush1.xpose.msra.mxu0 0.0
        %1395 = vmatprep.subr.mxu0 0.0
        %1396 = vmatpush1.xpose.msra.mxu0 0.0
        %1397 = vmatprep.subr.mxu0 0.0
        %1398 = vmatpush1.xpose.msra.mxu0 0.0
        %1399 = vmatprep.subr.mxu0 0.0
        %1400 = vmatpush1.xpose.msra.mxu0 0.0
        %1401 = vmatprep.subr.mxu0 0.0
        %1402 = vmatpush1.xpose.msra.mxu0 0.0
        %1403 = vmatprep.mubr.f32.mxu0 0.0
        %1404 = vmatmul.mubr.f32.gmra.mrb[0].mxu0 %v1337
        %v1405 = vpop.f32.mrb[0].mxu0
        %v1406 = vadd.f32 1e-09, %v1405
        %v1407 = vpop.f32.mrb[0].mxu0
        %1408 = vdwg.mxu0
        %v1409 = vrcp.pop %v1406
        %v1410 = vmul.f32 %v1262, %v1409
        %v1411 = vadd.f32 %v1410, 1e-09
        %v1412 = vlog2.pop %v1411
        %v1413 = vmul.f32 %v1412, 0.6931472
        %v1414 = vmul.f32 %v1410, %v1413
        %v1416 = vsel %vm659, %v1414, 0
        %1418 = vmatprep.subr.mxu0 0.0
        %1419 = vmatpush1.xpose.msra.mxu0 %v1416
        %1420 = vmatprep.subr.mxu0 0.0
        %1421 = vmatpush1.xpose.msra.mxu0 0.0
        %1422 = vmatprep.subr.mxu0 0.0
        %1423 = vmatpush1.xpose.msra.mxu0 0.0
        %1424 = vmatprep.subr.mxu0 0.0
        %1425 = vmatpush1.xpose.msra.mxu0 0.0
        %1426 = vmatprep.subr.mxu0 0.0
        %1427 = vmatpush1.xpose.msra.mxu0 0.0
        %1428 = vmatprep.subr.mxu0 0.0
        %1429 = vmatpush1.xpose.msra.mxu0 0.0
        %1430 = vmatprep.subr.mxu0 0.0
        %1431 = vmatpush1.xpose.msra.mxu0 0.0
        %1432 = vmatprep.subr.mxu0 0.0
        %1433 = vmatpush1.xpose.msra.mxu0 0.0
        %1434 = vmatprep.subr.mxu0 0.0
        %1435 = vmatpush1.xpose.msra.mxu0 0.0
        %1436 = vmatprep.subr.mxu0 0.0
        %1437 = vmatpush1.xpose.msra.mxu0 0.0
        %1438 = vmatprep.subr.mxu0 0.0
        %1439 = vmatpush1.xpose.msra.mxu0 0.0
        %1440 = vmatprep.subr.mxu0 0.0
        %1441 = vmatpush1.xpose.msra.mxu0 0.0
        %1442 = vmatprep.subr.mxu0 0.0
        %1443 = vmatpush1.xpose.msra.mxu0 0.0
        %1444 = vmatprep.subr.mxu0 0.0
        %1445 = vmatpush1.xpose.msra.mxu0 0.0
        %1446 = vmatprep.subr.mxu0 0.0
        %1447 = vmatpush1.xpose.msra.mxu0 0.0
        %1448 = vmatprep.subr.mxu0 0.0
        %1449 = vmatpush1.xpose.msra.mxu0 0.0
        %1450 = vmatprep.subr.mxu0 0.0
        %1451 = vmatpush1.xpose.msra.mxu0 0.0
        %1452 = vmatprep.subr.mxu0 0.0
        %1453 = vmatpush1.xpose.msra.mxu0 0.0
        %1454 = vmatprep.subr.mxu0 0.0
        %1455 = vmatpush1.xpose.msra.mxu0 0.0
        %1456 = vmatprep.subr.mxu0 0.0
        %1457 = vmatpush1.xpose.msra.mxu0 0.0
        %1458 = vmatprep.subr.mxu0 0.0
        %1459 = vmatpush1.xpose.msra.mxu0 0.0
        %1460 = vmatprep.subr.mxu0 0.0
        %1461 = vmatpush1.xpose.msra.mxu0 0.0
        %1462 = vmatprep.subr.mxu0 0.0
        %1463 = vmatpush1.xpose.msra.mxu0 0.0
        %1464 = vmatprep.subr.mxu0 0.0
        %1465 = vmatpush1.xpose.msra.mxu0 0.0
        %1466 = vmatprep.subr.mxu0 0.0
        %1467 = vmatpush1.xpose.msra.mxu0 0.0
        %1468 = vmatprep.subr.mxu0 0.0
        %1469 = vmatpush1.xpose.msra.mxu0 0.0
        %1470 = vmatprep.subr.mxu0 0.0
        %1471 = vmatpush1.xpose.msra.mxu0 0.0
        %1472 = vmatprep.subr.mxu0 0.0
        %1473 = vmatpush1.xpose.msra.mxu0 0.0
        %1474 = vmatprep.subr.mxu0 0.0
        %1475 = vmatpush1.xpose.msra.mxu0 0.0
        %1476 = vmatprep.subr.mxu0 0.0
        %1477 = vmatpush1.xpose.msra.mxu0 0.0
        %1478 = vmatprep.subr.mxu0 0.0
        %1479 = vmatpush1.xpose.msra.mxu0 0.0
        %1480 = vmatprep.subr.mxu0 0.0
        %1481 = vmatpush1.xpose.msra.mxu0 0.0
        %1482 = vmatprep.mubr.f32.mxu0 0.0
        %1483 = vmatmul.mubr.f32.gmra.mrb[0].mxu0 %v848
        %v1484 = vpop.f32.mrb[0].mxu0
        %v1485 = vadd.f32 2.8903718, %v1484
        %v1486 = vpop.f32.mrb[0].mxu0
        %1487 = vdwg.mxu0
        %v1488 = vmul.f32 %v1485, %v923
        %v1489 = vadd.f32 %v925, %v1488
        %v1490 = vld [vmem:[%s164 + $0x2] sm:$0x1]
        %v1491 = vld [vmem:[%s164 + $0x6] sm:$0x1]
        %v1492 = vld [vmem:[%s164 + $0xa] sm:$0x1]
        %v1493 = vld [vmem:[%s173 + $0x2] sm:$0x1]
        %v1494 = vld [vmem:[%s173 + $0x6] sm:$0x1]
        %v1495 = vadd.f32 %v1490, 3.1415927
        %v1496 = vadd.f32 %v1491, 3.1415927
        %v1497 = vadd.f32 %v1492, 3.1415927
        %v1498 = vmul.f32 %v1495, 2.864789
        %v1499 = vmul.f32 %v1496, 2.864789
        %v1500 = vmul.f32 %v1497, 2.864789
        %v1501 = vfloor.f32 %v1498
        %v1502 = vfloor.f32 %v1499
        %v1503 = vfloor.f32 %v1500
        %v1504 = vmax.f32 %v1501, 0.0
        %v1505 = vmax.f32 %v1502, 0.0
        %v1506 = vmax.f32 %v1503, 0.0
        %v1507 = vmin.f32 %v1504, 17.0
        %v1508 = vmin.f32 %v1505, 17.0
        %v1509 = vmin.f32 %v1506, 17.0
        %v1513 = vrot.slane %v1508, 7
        %v1514 = vsel %vm318, %v1513, %v1507
        %v1515 = vrot.slane %v1509, 6
        %v1516 = vsel %vm321, %v1515, %v1514
        %v1517 = vsel %vm344, %v1516, 0
        %1519 = vmatprep.subr.mxu0 0.0
        %1520 = vmatpush1.msra.mxu0 %v1517
        %1521 = vmatprep.subr.mxu0 0.0
        %1522 = vmatpush1.msra.mxu0 0.0
        %1523 = vmatprep.subr.mxu0 0.0
        %1524 = vmatpush1.msra.mxu0 0.0
        %1525 = vmatprep.subr.mxu0 0.0
        %1526 = vmatpush1.msra.mxu0 0.0
        %1527 = vmatprep.subr.mxu0 0.0
        %1528 = vmatpush1.msra.mxu0 0.0
        %1529 = vmatprep.subr.mxu0 0.0
        %1530 = vmatpush1.msra.mxu0 0.0
        %1531 = vmatprep.subr.mxu0 0.0
        %1532 = vmatpush1.msra.mxu0 0.0
        %1533 = vmatprep.subr.mxu0 0.0
        %1534 = vmatpush1.msra.mxu0 0.0
        %1535 = vmatprep.subr.mxu0 0.0
        %1536 = vmatpush1.msra.mxu0 0.0
        %1537 = vmatprep.subr.mxu0 0.0
        %1538 = vmatpush1.msra.mxu0 0.0
        %1539 = vmatprep.subr.mxu0 0.0
        %1540 = vmatpush1.msra.mxu0 0.0
        %1541 = vmatprep.subr.mxu0 0.0
        %1542 = vmatpush1.msra.mxu0 0.0
        %1543 = vmatprep.subr.mxu0 0.0
        %1544 = vmatpush1.msra.mxu0 0.0
        %1545 = vmatprep.subr.mxu0 0.0
        %1546 = vmatpush1.msra.mxu0 0.0
        %1547 = vmatprep.subr.mxu0 0.0
        %1548 = vmatpush1.msra.mxu0 0.0
        %1549 = vmatprep.subr.mxu0 0.0
        %1550 = vmatpush1.msra.mxu0 0.0
        %1551 = vmatprep.subr.mxu0 0.0
        %1552 = vmatpush1.msra.mxu0 0.0
        %1553 = vmatprep.subr.mxu0 0.0
        %1554 = vmatpush1.msra.mxu0 0.0
        %1555 = vmatprep.subr.mxu0 0.0
        %1556 = vmatpush1.msra.mxu0 0.0
        %1557 = vmatprep.subr.mxu0 0.0
        %1558 = vmatpush1.msra.mxu0 0.0
        %1559 = vmatprep.subr.mxu0 0.0
        %1560 = vmatpush1.msra.mxu0 0.0
        %1561 = vmatprep.subr.mxu0 0.0
        %1562 = vmatpush1.msra.mxu0 0.0
        %1563 = vmatprep.subr.mxu0 0.0
        %1564 = vmatpush1.msra.mxu0 0.0
        %1565 = vmatprep.subr.mxu0 0.0
        %1566 = vmatpush1.msra.mxu0 0.0
        %1567 = vmatprep.subr.mxu0 0.0
        %1568 = vmatpush1.msra.mxu0 0.0
        %1569 = vmatprep.subr.mxu0 0.0
        %1570 = vmatpush1.msra.mxu0 0.0
        %1571 = vmatprep.subr.mxu0 0.0
        %1572 = vmatpush1.msra.mxu0 0.0
        %1573 = vmatprep.subr.mxu0 0.0
        %1574 = vmatpush1.msra.mxu0 0.0
        %1575 = vmatprep.subr.mxu0 0.0
        %1576 = vmatpush1.msra.mxu0 0.0
        %1577 = vmatprep.subr.mxu0 0.0
        %1578 = vmatpush1.msra.mxu0 0.0
        %1579 = vmatprep.subr.mxu0 0.0
        %1580 = vmatpush1.msra.mxu0 0.0
        %1581 = vmatprep.subr.mxu0 0.0
        %1582 = vmatpush1.msra.mxu0 0.0
        %1583 = vmatprep.mubr.f32.mxu0 0.0
        %1584 = vmatmul.mubr.f32.gmra.mrb[0].mxu0 %v324
        %v1585 = vpop.f32.mrb[0].mxu0
        %v1586 = vadd.f32 0.0, %v1585
        %v1587 = vpop.f32.mrb[0].mxu0
        %1588 = vmatprep.mubr.f32.mxu0 0.0
        %1589 = vmatmul.mubr.f32.gmra.mrb[0].mxu0 %v327
        %v1590 = vpop.f32.mrb[0].mxu0
        %v1591 = vadd.f32 0.0, %v1590
        %v1592 = vpop.f32.mrb[0].mxu0
        %1593 = vmatprep.mubr.f32.mxu0 0.0
        %1594 = vmatmul.mubr.f32.gmra.mrb[0].mxu0 %v330
        %v1595 = vpop.f32.mrb[0].mxu0
        %v1596 = vadd.f32 0.0, %v1595
        %v1597 = vpop.f32.mrb[0].mxu0
        %1598 = vmatprep.mubr.f32.mxu0 0.0
        %1599 = vmatmul.mubr.f32.gmra.mrb[0].mxu0 %v333
        %v1600 = vpop.f32.mrb[0].mxu0
        %v1601 = vadd.f32 0.0, %v1600
        %v1602 = vpop.f32.mrb[0].mxu0
        %1603 = vmatprep.mubr.f32.mxu0 0.0
        %1604 = vmatmul.mubr.f32.gmra.mrb[0].mxu0 %v336
        %v1605 = vpop.f32.mrb[0].mxu0
        %v1606 = vadd.f32 0.0, %v1605
        %v1607 = vpop.f32.mrb[0].mxu0
        %1608 = vmatprep.mubr.f32.mxu0 0.0
        %1609 = vmatmul.mubr.f32.gmra.mrb[0].mxu0 %v339
        %v1610 = vpop.f32.mrb[0].mxu0
        %v1611 = vadd.f32 0.0, %v1610
        %v1612 = vpop.f32.mrb[0].mxu0
        %1613 = vmatprep.mubr.f32.mxu0 0.0
        %1614 = vmatmul.mubr.f32.gmra.mrb[0].mxu0 %v342
        %v1615 = vpop.f32.mrb[0].mxu0
        %v1616 = vadd.f32 0.0, %v1615
        %v1617 = vpop.f32.mrb[0].mxu0
        %1618 = vdwg.mxu0
        %v1619 = vsub.f32 %v1586, %v274
        %v1620 = vsub.f32 %v1591, %v277
        %v1621 = vsub.f32 %v1596, %v280
        %v1622 = vsub.f32 %v1601, %v283
        %v1623 = vsub.f32 %v1606, %v286
        %v1624 = vsub.f32 %v1611, %v289
        %v1625 = vsub.f32 %v1616, %v293
        %v1626 = vand.u32 2147483647, %v1619
        %v1627 = vand.u32 2147483647, %v1620
        %v1628 = vand.u32 2147483647, %v1621
        %v1629 = vand.u32 2147483647, %v1622
        %v1630 = vand.u32 2147483647, %v1623
        %v1631 = vand.u32 2147483647, %v1624
        %v1632 = vand.u32 2147483647, %v1625
        %vm1633 = vcmp.lt.f32.partialorder %v1626, 0.5
        %vm1634 = vcmp.lt.f32.partialorder %v1627, 0.5
        %vm1635 = vcmp.lt.f32.partialorder %v1628, 0.5
        %vm1636 = vcmp.lt.f32.partialorder %v1629, 0.5
        %vm1637 = vcmp.lt.f32.partialorder %v1630, 0.5
        %vm1638 = vcmp.lt.f32.partialorder %v1631, 0.5
        %vm1639 = vcmp.lt.f32.partialorder %v1632, 0.5
        %v1640 = vsel %vm1633, 1, 0
        %v1641 = vsel %vm1634, 1, 0
        %v1642 = vsel %vm1635, 1, 0
        %v1643 = vsel %vm1636, 1, 0
        %v1644 = vsel %vm1637, 1, 0
        %v1645 = vsel %vm1638, 1, 0
        %v1646 = vsel %vm1639, 1, 0
        %v1647 = vcvt.s32.f32 %v1640
        %v1648 = vcvt.s32.f32 %v1641
        %v1649 = vcvt.s32.f32 %v1642
        %v1650 = vcvt.s32.f32 %v1643
        %v1651 = vcvt.s32.f32 %v1644
        %v1652 = vcvt.s32.f32 %v1645
        %v1653 = vcvt.s32.f32 %v1646
        %v1656 = vrot.slane %v1494, 7
        %v1657 = vsel %vm318, %v1656, %v1493
        %v1658 = vsel %vm486, %v1657, 0
        %v1661 = vsel %vm486, %v1647, 0
        %v1664 = vsel %vm486, %v1648, 0
        %v1667 = vsel %vm486, %v1649, 0
        %v1670 = vsel %vm486, %v1650, 0
        %v1673 = vsel %vm486, %v1651, 0
        %v1676 = vsel %vm486, %v1652, 0
        %v1679 = vsel %vm486, %v1653, 0
        %1681 = vmatprep.subr.mxu0 0.0
        %1682 = vmatpush1.xpose.msra.mxu0 %v1661
        %1683 = vmatprep.subr.mxu0 0.0
        %1684 = vmatpush1.xpose.msra.mxu0 %v1664
        %1685 = vmatprep.subr.mxu0 0.0
        %1686 = vmatpush1.xpose.msra.mxu0 %v1667
        %1687 = vmatprep.subr.mxu0 0.0
        %1688 = vmatpush1.xpose.msra.mxu0 %v1670
        %1689 = vmatprep.subr.mxu0 0.0
        %1690 = vmatpush1.xpose.msra.mxu0 %v1673
        %1691 = vmatprep.subr.mxu0 0.0
        %1692 = vmatpush1.xpose.msra.mxu0 %v1676
        %1693 = vmatprep.subr.mxu0 0.0
        %1694 = vmatpush1.xpose.msra.mxu0 %v1679
        %1695 = vmatprep.subr.mxu0 0.0
        %1696 = vmatpush1.xpose.msra.mxu0 0.0
        %1697 = vmatprep.subr.mxu0 0.0
        %1698 = vmatpush1.xpose.msra.mxu0 0.0
        %1699 = vmatprep.subr.mxu0 0.0
        %1700 = vmatpush1.xpose.msra.mxu0 0.0
        %1701 = vmatprep.subr.mxu0 0.0
        %1702 = vmatpush1.xpose.msra.mxu0 0.0
        %1703 = vmatprep.subr.mxu0 0.0
        %1704 = vmatpush1.xpose.msra.mxu0 0.0
        %1705 = vmatprep.subr.mxu0 0.0
        %1706 = vmatpush1.xpose.msra.mxu0 0.0
        %1707 = vmatprep.subr.mxu0 0.0
        %1708 = vmatpush1.xpose.msra.mxu0 0.0
        %1709 = vmatprep.subr.mxu0 0.0
        %1710 = vmatpush1.xpose.msra.mxu0 0.0
        %1711 = vmatprep.subr.mxu0 0.0
        %1712 = vmatpush1.xpose.msra.mxu0 0.0
        %1713 = vmatprep.subr.mxu0 0.0
        %1714 = vmatpush1.xpose.msra.mxu0 0.0
        %1715 = vmatprep.subr.mxu0 0.0
        %1716 = vmatpush1.xpose.msra.mxu0 0.0
        %1717 = vmatprep.subr.mxu0 0.0
        %1718 = vmatpush1.xpose.msra.mxu0 0.0
        %1719 = vmatprep.subr.mxu0 0.0
        %1720 = vmatpush1.xpose.msra.mxu0 0.0
        %1721 = vmatprep.subr.mxu0 0.0
        %1722 = vmatpush1.xpose.msra.mxu0 0.0
        %1723 = vmatprep.subr.mxu0 0.0
        %1724 = vmatpush1.xpose.msra.mxu0 0.0
        %1725 = vmatprep.subr.mxu0 0.0
        %1726 = vmatpush1.xpose.msra.mxu0 0.0
        %1727 = vmatprep.subr.mxu0 0.0
        %1728 = vmatpush1.xpose.msra.mxu0 0.0
        %1729 = vmatprep.subr.mxu0 0.0
        %1730 = vmatpush1.xpose.msra.mxu0 0.0
        %1731 = vmatprep.subr.mxu0 0.0
        %1732 = vmatpush1.xpose.msra.mxu0 0.0
        %1733 = vmatprep.subr.mxu0 0.0
        %1734 = vmatpush1.xpose.msra.mxu0 0.0
        %1735 = vmatprep.subr.mxu0 0.0
        %1736 = vmatpush1.xpose.msra.mxu0 0.0
        %1737 = vmatprep.subr.mxu0 0.0
        %1738 = vmatpush1.xpose.msra.mxu0 0.0
        %1739 = vmatprep.subr.mxu0 0.0
        %1740 = vmatpush1.xpose.msra.mxu0 0.0
        %1741 = vmatprep.subr.mxu0 0.0
        %1742 = vmatpush1.xpose.msra.mxu0 0.0
        %1743 = vmatprep.subr.mxu0 0.0
        %1744 = vmatpush1.xpose.msra.mxu0 0.0
        %1745 = vmatprep.mubr.f32.mxu0 0.0
        %1746 = vmatmul.mubr.f32.gmra.mrb[0].mxu0 %v1658
        %v1747 = vpop.f32.mrb[0].mxu0
        %v1748 = vadd.f32 0.0, %v1747
        %v1749 = vpop.f32.mrb[0].mxu0
        %1750 = vdwg.mxu0
        %1751 = vmatprep.subr.mxu0 0.0
        %1752 = vmatpush1.xpose.msra.mxu0 %v1661
        %1753 = vmatprep.subr.mxu0 0.0
        %1754 = vmatpush1.xpose.msra.mxu0 %v1664
        %1755 = vmatprep.subr.mxu0 0.0
        %1756 = vmatpush1.xpose.msra.mxu0 %v1667
        %1757 = vmatprep.subr.mxu0 0.0
        %1758 = vmatpush1.xpose.msra.mxu0 %v1670
        %1759 = vmatprep.subr.mxu0 0.0
        %1760 = vmatpush1.xpose.msra.mxu0 %v1673
        %1761 = vmatprep.subr.mxu0 0.0
        %1762 = vmatpush1.xpose.msra.mxu0 %v1676
        %1763 = vmatprep.subr.mxu0 0.0
        %1764 = vmatpush1.xpose.msra.mxu0 %v1679
        %1765 = vmatprep.subr.mxu0 0.0
        %1766 = vmatpush1.xpose.msra.mxu0 0.0
        %1767 = vmatprep.subr.mxu0 0.0
        %1768 = vmatpush1.xpose.msra.mxu0 0.0
        %1769 = vmatprep.subr.mxu0 0.0
        %1770 = vmatpush1.xpose.msra.mxu0 0.0
        %1771 = vmatprep.subr.mxu0 0.0
        %1772 = vmatpush1.xpose.msra.mxu0 0.0
        %1773 = vmatprep.subr.mxu0 0.0
        %1774 = vmatpush1.xpose.msra.mxu0 0.0
        %1775 = vmatprep.subr.mxu0 0.0
        %1776 = vmatpush1.xpose.msra.mxu0 0.0
        %1777 = vmatprep.subr.mxu0 0.0
        %1778 = vmatpush1.xpose.msra.mxu0 0.0
        %1779 = vmatprep.subr.mxu0 0.0
        %1780 = vmatpush1.xpose.msra.mxu0 0.0
        %1781 = vmatprep.subr.mxu0 0.0
        %1782 = vmatpush1.xpose.msra.mxu0 0.0
        %1783 = vmatprep.subr.mxu0 0.0
        %1784 = vmatpush1.xpose.msra.mxu0 0.0
        %1785 = vmatprep.subr.mxu0 0.0
        %1786 = vmatpush1.xpose.msra.mxu0 0.0
        %1787 = vmatprep.subr.mxu0 0.0
        %1788 = vmatpush1.xpose.msra.mxu0 0.0
        %1789 = vmatprep.subr.mxu0 0.0
        %1790 = vmatpush1.xpose.msra.mxu0 0.0
        %1791 = vmatprep.subr.mxu0 0.0
        %1792 = vmatpush1.xpose.msra.mxu0 0.0
        %1793 = vmatprep.subr.mxu0 0.0
        %1794 = vmatpush1.xpose.msra.mxu0 0.0
        %1795 = vmatprep.subr.mxu0 0.0
        %1796 = vmatpush1.xpose.msra.mxu0 0.0
        %1797 = vmatprep.subr.mxu0 0.0
        %1798 = vmatpush1.xpose.msra.mxu0 0.0
        %1799 = vmatprep.subr.mxu0 0.0
        %1800 = vmatpush1.xpose.msra.mxu0 0.0
        %1801 = vmatprep.subr.mxu0 0.0
        %1802 = vmatpush1.xpose.msra.mxu0 0.0
        %1803 = vmatprep.subr.mxu0 0.0
        %1804 = vmatpush1.xpose.msra.mxu0 0.0
        %1805 = vmatprep.subr.mxu0 0.0
        %1806 = vmatpush1.xpose.msra.mxu0 0.0
        %1807 = vmatprep.subr.mxu0 0.0
        %1808 = vmatpush1.xpose.msra.mxu0 0.0
        %1809 = vmatprep.subr.mxu0 0.0
        %1810 = vmatpush1.xpose.msra.mxu0 0.0
        %1811 = vmatprep.subr.mxu0 0.0
        %1812 = vmatpush1.xpose.msra.mxu0 0.0
        %1813 = vmatprep.subr.mxu0 0.0
        %1814 = vmatpush1.xpose.msra.mxu0 0.0
        %1815 = vmatprep.mubr.f32.mxu0 0.0
        %1816 = vmatmul.mubr.f32.gmra.mrb[0].mxu0 %v581
        %v1817 = vpop.f32.mrb[0].mxu0
        %v1818 = vadd.f32 1e-09, %v1817
        %v1819 = vpop.f32.mrb[0].mxu0
        %1820 = vdwg.mxu0
        %v1821 = vlaneseq
        %v1822 = vshrl.u32 %v1821, 7
        %v1823 = vsub.s32 0, %v1822
        %v1824 = vrot.slane %v1818, %v1823
        %v1825 = vrcp.pop %v1824
        %v1826 = vmul.f32 %v1748, %v1825
        %v1828 = vsel %vm659, %v1826, 0
        %1830 = vmatprep.subr.mxu0 0.0
        %1831 = vmatpush1.msra.mxu0 %v243
        %1832 = vmatprep.subr.mxu0 0.0
        %1833 = vmatpush1.msra.mxu0 %v244
        %1834 = vmatprep.subr.mxu0 0.0
        %1835 = vmatpush1.msra.mxu0 %v245
        %1836 = vmatprep.subr.mxu0 0.0
        %1837 = vmatpush1.msra.mxu0 %v246
        %1838 = vmatprep.subr.mxu0 0.0
        %1839 = vmatpush1.msra.mxu0 %v247
        %1840 = vmatprep.subr.mxu0 0.0
        %1841 = vmatpush1.msra.mxu0 %v248
        %1842 = vmatprep.subr.mxu0 0.0
        %1843 = vmatpush1.msra.mxu0 %v664
        %1844 = vmatprep.subr.mxu0 0.0
        %1845 = vmatpush1.msra.mxu0 0.0
        %1846 = vmatprep.subr.mxu0 0.0
        %1847 = vmatpush1.msra.mxu0 0.0
        %1848 = vmatprep.subr.mxu0 0.0
        %1849 = vmatpush1.msra.mxu0 0.0
        %1850 = vmatprep.subr.mxu0 0.0
        %1851 = vmatpush1.msra.mxu0 0.0
        %1852 = vmatprep.subr.mxu0 0.0
        %1853 = vmatpush1.msra.mxu0 0.0
        %1854 = vmatprep.subr.mxu0 0.0
        %1855 = vmatpush1.msra.mxu0 0.0
        %1856 = vmatprep.subr.mxu0 0.0
        %1857 = vmatpush1.msra.mxu0 0.0
        %1858 = vmatprep.subr.mxu0 0.0
        %1859 = vmatpush1.msra.mxu0 0.0
        %1860 = vmatprep.subr.mxu0 0.0
        %1861 = vmatpush1.msra.mxu0 0.0
        %1862 = vmatprep.subr.mxu0 0.0
        %1863 = vmatpush1.msra.mxu0 0.0
        %1864 = vmatprep.subr.mxu0 0.0
        %1865 = vmatpush1.msra.mxu0 0.0
        %1866 = vmatprep.subr.mxu0 0.0
        %1867 = vmatpush1.msra.mxu0 0.0
        %1868 = vmatprep.subr.mxu0 0.0
        %1869 = vmatpush1.msra.mxu0 0.0
        %1870 = vmatprep.subr.mxu0 0.0
        %1871 = vmatpush1.msra.mxu0 0.0
        %1872 = vmatprep.subr.mxu0 0.0
        %1873 = vmatpush1.msra.mxu0 0.0
        %1874 = vmatprep.subr.mxu0 0.0
        %1875 = vmatpush1.msra.mxu0 0.0
        %1876 = vmatprep.subr.mxu0 0.0
        %1877 = vmatpush1.msra.mxu0 0.0
        %1878 = vmatprep.subr.mxu0 0.0
        %1879 = vmatpush1.msra.mxu0 0.0
        %1880 = vmatprep.subr.mxu0 0.0
        %1881 = vmatpush1.msra.mxu0 0.0
        %1882 = vmatprep.subr.mxu0 0.0
        %1883 = vmatpush1.msra.mxu0 0.0
        %1884 = vmatprep.subr.mxu0 0.0
        %1885 = vmatpush1.msra.mxu0 0.0
        %1886 = vmatprep.subr.mxu0 0.0
        %1887 = vmatpush1.msra.mxu0 0.0
        %1888 = vmatprep.subr.mxu0 0.0
        %1889 = vmatpush1.msra.mxu0 0.0
        %1890 = vmatprep.subr.mxu0 0.0
        %1891 = vmatpush1.msra.mxu0 0.0
        %1892 = vmatprep.subr.mxu0 0.0
        %1893 = vmatpush1.msra.mxu0 0.0
        %1894 = vmatprep.mubr.f32.mxu0 0.0
        %1895 = vmatmul.mubr.f32.gmra.mrb[0].mxu0 %v1828
        %v1896 = vpop.f32.mrb[0].mxu0
        %v1897 = vadd.f32 0.0, %v1896
        %v1898 = vpop.f32.mrb[0].mxu0
        %1899 = vdwg.mxu0
        %v1901 = vsel %vm271, %v1897, 0
        %1903 = vmatprep.subr.mxu0 0.0
        %1904 = vmatpush1.xpose.msra.mxu0 %v324
        %1905 = vmatprep.subr.mxu0 0.0
        %1906 = vmatpush1.xpose.msra.mxu0 %v327
        %1907 = vmatprep.subr.mxu0 0.0
        %1908 = vmatpush1.xpose.msra.mxu0 %v330
        %1909 = vmatprep.subr.mxu0 0.0
        %1910 = vmatpush1.xpose.msra.mxu0 %v333
        %1911 = vmatprep.subr.mxu0 0.0
        %1912 = vmatpush1.xpose.msra.mxu0 %v336
        %1913 = vmatprep.subr.mxu0 0.0
        %1914 = vmatpush1.xpose.msra.mxu0 %v339
        %1915 = vmatprep.subr.mxu0 0.0
        %1916 = vmatpush1.xpose.msra.mxu0 %v342
        %1917 = vmatprep.subr.mxu0 0.0
        %1918 = vmatpush1.xpose.msra.mxu0 0.0
        %1919 = vmatprep.subr.mxu0 0.0
        %1920 = vmatpush1.xpose.msra.mxu0 0.0
        %1921 = vmatprep.subr.mxu0 0.0
        %1922 = vmatpush1.xpose.msra.mxu0 0.0
        %1923 = vmatprep.subr.mxu0 0.0
        %1924 = vmatpush1.xpose.msra.mxu0 0.0
        %1925 = vmatprep.subr.mxu0 0.0
        %1926 = vmatpush1.xpose.msra.mxu0 0.0
        %1927 = vmatprep.subr.mxu0 0.0
        %1928 = vmatpush1.xpose.msra.mxu0 0.0
        %1929 = vmatprep.subr.mxu0 0.0
        %1930 = vmatpush1.xpose.msra.mxu0 0.0
        %1931 = vmatprep.subr.mxu0 0.0
        %1932 = vmatpush1.xpose.msra.mxu0 0.0
        %1933 = vmatprep.subr.mxu0 0.0
        %1934 = vmatpush1.xpose.msra.mxu0 0.0
        %1935 = vmatprep.subr.mxu0 0.0
        %1936 = vmatpush1.xpose.msra.mxu0 0.0
        %1937 = vmatprep.subr.mxu0 0.0
        %1938 = vmatpush1.xpose.msra.mxu0 0.0
        %1939 = vmatprep.subr.mxu0 0.0
        %1940 = vmatpush1.xpose.msra.mxu0 0.0
        %1941 = vmatprep.subr.mxu0 0.0
        %1942 = vmatpush1.xpose.msra.mxu0 0.0
        %1943 = vmatprep.subr.mxu0 0.0
        %1944 = vmatpush1.xpose.msra.mxu0 0.0
        %1945 = vmatprep.subr.mxu0 0.0
        %1946 = vmatpush1.xpose.msra.mxu0 0.0
        %1947 = vmatprep.subr.mxu0 0.0
        %1948 = vmatpush1.xpose.msra.mxu0 0.0
        %1949 = vmatprep.subr.mxu0 0.0
        %1950 = vmatpush1.xpose.msra.mxu0 0.0
        %1951 = vmatprep.subr.mxu0 0.0
        %1952 = vmatpush1.xpose.msra.mxu0 0.0
        %1953 = vmatprep.subr.mxu0 0.0
        %1954 = vmatpush1.xpose.msra.mxu0 0.0
        %1955 = vmatprep.subr.mxu0 0.0
        %1956 = vmatpush1.xpose.msra.mxu0 0.0
        %1957 = vmatprep.subr.mxu0 0.0
        %1958 = vmatpush1.xpose.msra.mxu0 0.0
        %1959 = vmatprep.subr.mxu0 0.0
        %1960 = vmatpush1.xpose.msra.mxu0 0.0
        %1961 = vmatprep.subr.mxu0 0.0
        %1962 = vmatpush1.xpose.msra.mxu0 0.0
        %1963 = vmatprep.subr.mxu0 0.0
        %1964 = vmatpush1.xpose.msra.mxu0 0.0
        %1965 = vmatprep.subr.mxu0 0.0
        %1966 = vmatpush1.xpose.msra.mxu0 0.0
        %1967 = vmatprep.mubr.f32.mxu0 0.0
        %1968 = vmatmul.mubr.f32.gmra.mrb[0].mxu0 %v1901
        %v1969 = vpop.f32.mrb[0].mxu0
        %v1970 = vadd.f32 1e-09, %v1969
        %v1971 = vpop.f32.mrb[0].mxu0
        %1972 = vdwg.mxu0
        %v1973 = vrcp.pop %v1970
        %v1974 = vmul.f32 %v1826, %v1973
        %v1975 = vadd.f32 %v1974, 1e-09
        %v1976 = vlog2.pop %v1975
        %v1977 = vmul.f32 %v1976, 0.6931472
        %v1978 = vmul.f32 %v1974, %v1977
        %v1980 = vsel %vm659, %v1978, 0
        %1982 = vmatprep.subr.mxu0 0.0
        %1983 = vmatpush1.xpose.msra.mxu0 %v1980
        %1984 = vmatprep.subr.mxu0 0.0
        %1985 = vmatpush1.xpose.msra.mxu0 0.0
        %1986 = vmatprep.subr.mxu0 0.0
        %1987 = vmatpush1.xpose.msra.mxu0 0.0
        %1988 = vmatprep.subr.mxu0 0.0
        %1989 = vmatpush1.xpose.msra.mxu0 0.0
        %1990 = vmatprep.subr.mxu0 0.0
        %1991 = vmatpush1.xpose.msra.mxu0 0.0
        %1992 = vmatprep.subr.mxu0 0.0
        %1993 = vmatpush1.xpose.msra.mxu0 0.0
        %1994 = vmatprep.subr.mxu0 0.0
        %1995 = vmatpush1.xpose.msra.mxu0 0.0
        %1996 = vmatprep.subr.mxu0 0.0
        %1997 = vmatpush1.xpose.msra.mxu0 0.0
        %1998 = vmatprep.subr.mxu0 0.0
        %1999 = vmatpush1.xpose.msra.mxu0 0.0
        %2000 = vmatprep.subr.mxu0 0.0
        %2001 = vmatpush1.xpose.msra.mxu0 0.0
        %2002 = vmatprep.subr.mxu0 0.0
        %2003 = vmatpush1.xpose.msra.mxu0 0.0
        %2004 = vmatprep.subr.mxu0 0.0
        %2005 = vmatpush1.xpose.msra.mxu0 0.0
        %2006 = vmatprep.subr.mxu0 0.0
        %2007 = vmatpush1.xpose.msra.mxu0 0.0
        %2008 = vmatprep.subr.mxu0 0.0
        %2009 = vmatpush1.xpose.msra.mxu0 0.0
        %2010 = vmatprep.subr.mxu0 0.0
        %2011 = vmatpush1.xpose.msra.mxu0 0.0
        %2012 = vmatprep.subr.mxu0 0.0
        %2013 = vmatpush1.xpose.msra.mxu0 0.0
        %2014 = vmatprep.subr.mxu0 0.0
        %2015 = vmatpush1.xpose.msra.mxu0 0.0
        %2016 = vmatprep.subr.mxu0 0.0
        %2017 = vmatpush1.xpose.msra.mxu0 0.0
        %2018 = vmatprep.subr.mxu0 0.0
        %2019 = vmatpush1.xpose.msra.mxu0 0.0
        %2020 = vmatprep.subr.mxu0 0.0
        %2021 = vmatpush1.xpose.msra.mxu0 0.0
        %2022 = vmatprep.subr.mxu0 0.0
        %2023 = vmatpush1.xpose.msra.mxu0 0.0
        %2024 = vmatprep.subr.mxu0 0.0
        %2025 = vmatpush1.xpose.msra.mxu0 0.0
        %2026 = vmatprep.subr.mxu0 0.0
        %2027 = vmatpush1.xpose.msra.mxu0 0.0
        %2028 = vmatprep.subr.mxu0 0.0
        %2029 = vmatpush1.xpose.msra.mxu0 0.0
        %2030 = vmatprep.subr.mxu0 0.0
        %2031 = vmatpush1.xpose.msra.mxu0 0.0
        %2032 = vmatprep.subr.mxu0 0.0
        %2033 = vmatpush1.xpose.msra.mxu0 0.0
        %2034 = vmatprep.subr.mxu0 0.0
        %2035 = vmatpush1.xpose.msra.mxu0 0.0
        %2036 = vmatprep.subr.mxu0 0.0
        %2037 = vmatpush1.xpose.msra.mxu0 0.0
        %2038 = vmatprep.subr.mxu0 0.0
        %2039 = vmatpush1.xpose.msra.mxu0 0.0
        %2040 = vmatprep.subr.mxu0 0.0
        %2041 = vmatpush1.xpose.msra.mxu0 0.0
        %2042 = vmatprep.subr.mxu0 0.0
        %2043 = vmatpush1.xpose.msra.mxu0 0.0
        %2044 = vmatprep.subr.mxu0 0.0
        %2045 = vmatpush1.xpose.msra.mxu0 0.0
        %2046 = vmatprep.mubr.f32.mxu0 0.0
        %2047 = vmatmul.mubr.f32.gmra.mrb[0].mxu0 %v848
        %v2048 = vpop.f32.mrb[0].mxu0
        %v2049 = vadd.f32 2.8903718, %v2048
        %v2050 = vpop.f32.mrb[0].mxu0
        %2051 = vdwg.mxu0
        %v2052 = vmul.f32 %v2049, %v923
        %v2053 = vadd.f32 %v1489, %v2052
        %v2054 = vld [vmem:[%s164 + $0x3] sm:$0x1]
        %v2055 = vld [vmem:[%s164 + $0x7] sm:$0x1]
        %v2056 = vld [vmem:[%s164 + $0xb] sm:$0x1]
        %v2057 = vld [vmem:[%s173 + $0x3] sm:$0x1]
        %v2058 = vld [vmem:[%s173 + $0x7] sm:$0x1]
        %v2059 = vadd.f32 %v2054, 3.1415927
        %v2060 = vadd.f32 %v2055, 3.1415927
        %v2061 = vadd.f32 %v2056, 3.1415927
        %v2062 = vmul.f32 %v2059, 2.864789
        %v2063 = vmul.f32 %v2060, 2.864789
        %v2064 = vmul.f32 %v2061, 2.864789
        %v2065 = vfloor.f32 %v2062
        %v2066 = vfloor.f32 %v2063
        %v2067 = vfloor.f32 %v2064
        %v2068 = vmax.f32 %v2065, 0.0
        %v2069 = vmax.f32 %v2066, 0.0
        %v2070 = vmax.f32 %v2067, 0.0
        %v2071 = vmin.f32 %v2068, 17.0
        %v2072 = vmin.f32 %v2069, 17.0
        %v2073 = vmin.f32 %v2070, 17.0
        %v2077 = vrot.slane %v2072, 7
        %v2078 = vsel %vm318, %v2077, %v2071
        %v2079 = vrot.slane %v2073, 6
        %v2080 = vsel %vm321, %v2079, %v2078
        %v2081 = vsel %vm344, %v2080, 0
        %2083 = vmatprep.subr.mxu0 0.0
        %2084 = vmatpush1.msra.mxu0 %v2081
        %2085 = vmatprep.subr.mxu0 0.0
        %2086 = vmatpush1.msra.mxu0 0.0
        %2087 = vmatprep.subr.mxu0 0.0
        %2088 = vmatpush1.msra.mxu0 0.0
        %2089 = vmatprep.subr.mxu0 0.0
        %2090 = vmatpush1.msra.mxu0 0.0
        %2091 = vmatprep.subr.mxu0 0.0
        %2092 = vmatpush1.msra.mxu0 0.0
        %2093 = vmatprep.subr.mxu0 0.0
        %2094 = vmatpush1.msra.mxu0 0.0
        %2095 = vmatprep.subr.mxu0 0.0
        %2096 = vmatpush1.msra.mxu0 0.0
        %2097 = vmatprep.subr.mxu0 0.0
        %2098 = vmatpush1.msra.mxu0 0.0
        %2099 = vmatprep.subr.mxu0 0.0
        %2100 = vmatpush1.msra.mxu0 0.0
        %2101 = vmatprep.subr.mxu0 0.0
        %2102 = vmatpush1.msra.mxu0 0.0
        %2103 = vmatprep.subr.mxu0 0.0
        %2104 = vmatpush1.msra.mxu0 0.0
        %2105 = vmatprep.subr.mxu0 0.0
        %2106 = vmatpush1.msra.mxu0 0.0
        %2107 = vmatprep.subr.mxu0 0.0
        %2108 = vmatpush1.msra.mxu0 0.0
        %2109 = vmatprep.subr.mxu0 0.0
        %2110 = vmatpush1.msra.mxu0 0.0
        %2111 = vmatprep.subr.mxu0 0.0
        %2112 = vmatpush1.msra.mxu0 0.0
        %2113 = vmatprep.subr.mxu0 0.0
        %2114 = vmatpush1.msra.mxu0 0.0
        %2115 = vmatprep.subr.mxu0 0.0
        %2116 = vmatpush1.msra.mxu0 0.0
        %2117 = vmatprep.subr.mxu0 0.0
        %2118 = vmatpush1.msra.mxu0 0.0
        %2119 = vmatprep.subr.mxu0 0.0
        %2120 = vmatpush1.msra.mxu0 0.0
        %2121 = vmatprep.subr.mxu0 0.0
        %2122 = vmatpush1.msra.mxu0 0.0
        %2123 = vmatprep.subr.mxu0 0.0
        %2124 = vmatpush1.msra.mxu0 0.0
        %2125 = vmatprep.subr.mxu0 0.0
        %2126 = vmatpush1.msra.mxu0 0.0
        %2127 = vmatprep.subr.mxu0 0.0
        %2128 = vmatpush1.msra.mxu0 0.0
        %2129 = vmatprep.subr.mxu0 0.0
        %2130 = vmatpush1.msra.mxu0 0.0
        %2131 = vmatprep.subr.mxu0 0.0
        %2132 = vmatpush1.msra.mxu0 0.0
        %2133 = vmatprep.subr.mxu0 0.0
        %2134 = vmatpush1.msra.mxu0 0.0
        %2135 = vmatprep.subr.mxu0 0.0
        %2136 = vmatpush1.msra.mxu0 0.0
        %2137 = vmatprep.subr.mxu0 0.0
        %2138 = vmatpush1.msra.mxu0 0.0
        %2139 = vmatprep.subr.mxu0 0.0
        %2140 = vmatpush1.msra.mxu0 0.0
        %2141 = vmatprep.subr.mxu0 0.0
        %2142 = vmatpush1.msra.mxu0 0.0
        %2143 = vmatprep.subr.mxu0 0.0
        %2144 = vmatpush1.msra.mxu0 0.0
        %2145 = vmatprep.subr.mxu0 0.0
        %2146 = vmatpush1.msra.mxu0 0.0
        %2147 = vmatprep.mubr.f32.mxu0 0.0
        %2148 = vmatmul.mubr.f32.gmra.mrb[0].mxu0 %v324
        %v2149 = vpop.f32.mrb[0].mxu0
        %v2150 = vadd.f32 0.0, %v2149
        %v2151 = vpop.f32.mrb[0].mxu0
        %2152 = vmatprep.mubr.f32.mxu0 0.0
        %2153 = vmatmul.mubr.f32.gmra.mrb[0].mxu0 %v327
        %v2154 = vpop.f32.mrb[0].mxu0
        %v2155 = vadd.f32 0.0, %v2154
        %v2156 = vpop.f32.mrb[0].mxu0
        %2157 = vmatprep.mubr.f32.mxu0 0.0
        %2158 = vmatmul.mubr.f32.gmra.mrb[0].mxu0 %v330
        %v2159 = vpop.f32.mrb[0].mxu0
        %v2160 = vadd.f32 0.0, %v2159
        %v2161 = vpop.f32.mrb[0].mxu0
        %2162 = vmatprep.mubr.f32.mxu0 0.0
        %2163 = vmatmul.mubr.f32.gmra.mrb[0].mxu0 %v333
        %v2164 = vpop.f32.mrb[0].mxu0
        %v2165 = vadd.f32 0.0, %v2164
        %v2166 = vpop.f32.mrb[0].mxu0
        %2167 = vmatprep.mubr.f32.mxu0 0.0
        %2168 = vmatmul.mubr.f32.gmra.mrb[0].mxu0 %v336
        %v2169 = vpop.f32.mrb[0].mxu0
        %v2170 = vadd.f32 0.0, %v2169
        %v2171 = vpop.f32.mrb[0].mxu0
        %2172 = vmatprep.mubr.f32.mxu0 0.0
        %2173 = vmatmul.mubr.f32.gmra.mrb[0].mxu0 %v339
        %v2174 = vpop.f32.mrb[0].mxu0
        %v2175 = vadd.f32 0.0, %v2174
        %v2176 = vpop.f32.mrb[0].mxu0
        %2177 = vmatprep.mubr.f32.mxu0 0.0
        %2178 = vmatmul.mubr.f32.gmra.mrb[0].mxu0 %v342
        %v2179 = vpop.f32.mrb[0].mxu0
        %v2180 = vadd.f32 0.0, %v2179
        %v2181 = vpop.f32.mrb[0].mxu0
        %2182 = vdwg.mxu0
        %v2183 = vsub.f32 %v2150, %v274
        %v2184 = vsub.f32 %v2155, %v277
        %v2185 = vsub.f32 %v2160, %v280
        %v2186 = vsub.f32 %v2165, %v283
        %v2187 = vsub.f32 %v2170, %v286
        %v2188 = vsub.f32 %v2175, %v289
        %v2189 = vsub.f32 %v2180, %v293
        %v2190 = vand.u32 2147483647, %v2183
        %v2191 = vand.u32 2147483647, %v2184
        %v2192 = vand.u32 2147483647, %v2185
        %v2193 = vand.u32 2147483647, %v2186
        %v2194 = vand.u32 2147483647, %v2187
        %v2195 = vand.u32 2147483647, %v2188
        %v2196 = vand.u32 2147483647, %v2189
        %vm2197 = vcmp.lt.f32.partialorder %v2190, 0.5
        %vm2198 = vcmp.lt.f32.partialorder %v2191, 0.5
        %vm2199 = vcmp.lt.f32.partialorder %v2192, 0.5
        %vm2200 = vcmp.lt.f32.partialorder %v2193, 0.5
        %vm2201 = vcmp.lt.f32.partialorder %v2194, 0.5
        %vm2202 = vcmp.lt.f32.partialorder %v2195, 0.5
        %vm2203 = vcmp.lt.f32.partialorder %v2196, 0.5
        %v2204 = vsel %vm2197, 1, 0
        %v2205 = vsel %vm2198, 1, 0
        %v2206 = vsel %vm2199, 1, 0
        %v2207 = vsel %vm2200, 1, 0
        %v2208 = vsel %vm2201, 1, 0
        %v2209 = vsel %vm2202, 1, 0
        %v2210 = vsel %vm2203, 1, 0
        %v2211 = vcvt.s32.f32 %v2204
        %v2212 = vcvt.s32.f32 %v2205
        %v2213 = vcvt.s32.f32 %v2206
        %v2214 = vcvt.s32.f32 %v2207
        %v2215 = vcvt.s32.f32 %v2208
        %v2216 = vcvt.s32.f32 %v2209
        %v2217 = vcvt.s32.f32 %v2210
        %v2220 = vrot.slane %v2058, 7
        %v2221 = vsel %vm318, %v2220, %v2057
        %v2222 = vsel %vm486, %v2221, 0
        %v2225 = vsel %vm486, %v2211, 0
        %v2228 = vsel %vm486, %v2212, 0
        %v2231 = vsel %vm486, %v2213, 0
        %v2234 = vsel %vm486, %v2214, 0
        %v2237 = vsel %vm486, %v2215, 0
        %v2240 = vsel %vm486, %v2216, 0
        %v2243 = vsel %vm486, %v2217, 0
        %2245 = vmatprep.subr.mxu0 0.0
        %2246 = vmatpush1.xpose.msra.mxu0 %v2225
        %2247 = vmatprep.subr.mxu0 0.0
        %2248 = vmatpush1.xpose.msra.mxu0 %v2228
        %2249 = vmatprep.subr.mxu0 0.0
        %2250 = vmatpush1.xpose.msra.mxu0 %v2231
        %2251 = vmatprep.subr.mxu0 0.0
        %2252 = vmatpush1.xpose.msra.mxu0 %v2234
        %2253 = vmatprep.subr.mxu0 0.0
        %2254 = vmatpush1.xpose.msra.mxu0 %v2237
        %2255 = vmatprep.subr.mxu0 0.0
        %2256 = vmatpush1.xpose.msra.mxu0 %v2240
        %2257 = vmatprep.subr.mxu0 0.0
        %2258 = vmatpush1.xpose.msra.mxu0 %v2243
        %2259 = vmatprep.subr.mxu0 0.0
        %2260 = vmatpush1.xpose.msra.mxu0 0.0
        %2261 = vmatprep.subr.mxu0 0.0
        %2262 = vmatpush1.xpose.msra.mxu0 0.0
        %2263 = vmatprep.subr.mxu0 0.0
        %2264 = vmatpush1.xpose.msra.mxu0 0.0
        %2265 = vmatprep.subr.mxu0 0.0
        %2266 = vmatpush1.xpose.msra.mxu0 0.0
        %2267 = vmatprep.subr.mxu0 0.0
        %2268 = vmatpush1.xpose.msra.mxu0 0.0
        %2269 = vmatprep.subr.mxu0 0.0
        %2270 = vmatpush1.xpose.msra.mxu0 0.0
        %2271 = vmatprep.subr.mxu0 0.0
        %2272 = vmatpush1.xpose.msra.mxu0 0.0
        %2273 = vmatprep.subr.mxu0 0.0
        %2274 = vmatpush1.xpose.msra.mxu0 0.0
        %2275 = vmatprep.subr.mxu0 0.0
        %2276 = vmatpush1.xpose.msra.mxu0 0.0
        %2277 = vmatprep.subr.mxu0 0.0
        %2278 = vmatpush1.xpose.msra.mxu0 0.0
        %2279 = vmatprep.subr.mxu0 0.0
        %2280 = vmatpush1.xpose.msra.mxu0 0.0
        %2281 = vmatprep.subr.mxu0 0.0
        %2282 = vmatpush1.xpose.msra.mxu0 0.0
        %2283 = vmatprep.subr.mxu0 0.0
        %2284 = vmatpush1.xpose.msra.mxu0 0.0
        %2285 = vmatprep.subr.mxu0 0.0
        %2286 = vmatpush1.xpose.msra.mxu0 0.0
        %2287 = vmatprep.subr.mxu0 0.0
        %2288 = vmatpush1.xpose.msra.mxu0 0.0
        %2289 = vmatprep.subr.mxu0 0.0
        %2290 = vmatpush1.xpose.msra.mxu0 0.0
        %2291 = vmatprep.subr.mxu0 0.0
        %2292 = vmatpush1.xpose.msra.mxu0 0.0
        %2293 = vmatprep.subr.mxu0 0.0
        %2294 = vmatpush1.xpose.msra.mxu0 0.0
        %2295 = vmatprep.subr.mxu0 0.0
        %2296 = vmatpush1.xpose.msra.mxu0 0.0
        %2297 = vmatprep.subr.mxu0 0.0
        %2298 = vmatpush1.xpose.msra.mxu0 0.0
        %2299 = vmatprep.subr.mxu0 0.0
        %2300 = vmatpush1.xpose.msra.mxu0 0.0
        %2301 = vmatprep.subr.mxu0 0.0
        %2302 = vmatpush1.xpose.msra.mxu0 0.0
        %2303 = vmatprep.subr.mxu0 0.0
        %2304 = vmatpush1.xpose.msra.mxu0 0.0
        %2305 = vmatprep.subr.mxu0 0.0
        %2306 = vmatpush1.xpose.msra.mxu0 0.0
        %2307 = vmatprep.subr.mxu0 0.0
        %2308 = vmatpush1.xpose.msra.mxu0 0.0
        %2309 = vmatprep.mubr.f32.mxu0 0.0
        %2310 = vmatmul.mubr.f32.gmra.mrb[0].mxu0 %v2222
        %v2311 = vpop.f32.mrb[0].mxu0
        %v2312 = vadd.f32 0.0, %v2311
        %v2313 = vpop.f32.mrb[0].mxu0
        %2314 = vdwg.mxu0
        %2315 = vmatprep.subr.mxu0 0.0
        %2316 = vmatpush1.xpose.msra.mxu0 %v2225
        %2317 = vmatprep.subr.mxu0 0.0
        %2318 = vmatpush1.xpose.msra.mxu0 %v2228
        %2319 = vmatprep.subr.mxu0 0.0
        %2320 = vmatpush1.xpose.msra.mxu0 %v2231
        %2321 = vmatprep.subr.mxu0 0.0
        %2322 = vmatpush1.xpose.msra.mxu0 %v2234
        %2323 = vmatprep.subr.mxu0 0.0
        %2324 = vmatpush1.xpose.msra.mxu0 %v2237
        %2325 = vmatprep.subr.mxu0 0.0
        %2326 = vmatpush1.xpose.msra.mxu0 %v2240
        %2327 = vmatprep.subr.mxu0 0.0
        %2328 = vmatpush1.xpose.msra.mxu0 %v2243
        %2329 = vmatprep.subr.mxu0 0.0
        %2330 = vmatpush1.xpose.msra.mxu0 0.0
        %2331 = vmatprep.subr.mxu0 0.0
        %2332 = vmatpush1.xpose.msra.mxu0 0.0
        %2333 = vmatprep.subr.mxu0 0.0
        %2334 = vmatpush1.xpose.msra.mxu0 0.0
        %2335 = vmatprep.subr.mxu0 0.0
        %2336 = vmatpush1.xpose.msra.mxu0 0.0
        %2337 = vmatprep.subr.mxu0 0.0
        %2338 = vmatpush1.xpose.msra.mxu0 0.0
        %2339 = vmatprep.subr.mxu0 0.0
        %2340 = vmatpush1.xpose.msra.mxu0 0.0
        %2341 = vmatprep.subr.mxu0 0.0
        %2342 = vmatpush1.xpose.msra.mxu0 0.0
        %2343 = vmatprep.subr.mxu0 0.0
        %2344 = vmatpush1.xpose.msra.mxu0 0.0
        %2345 = vmatprep.subr.mxu0 0.0
        %2346 = vmatpush1.xpose.msra.mxu0 0.0
        %2347 = vmatprep.subr.mxu0 0.0
        %2348 = vmatpush1.xpose.msra.mxu0 0.0
        %2349 = vmatprep.subr.mxu0 0.0
        %2350 = vmatpush1.xpose.msra.mxu0 0.0
        %2351 = vmatprep.subr.mxu0 0.0
        %2352 = vmatpush1.xpose.msra.mxu0 0.0
        %2353 = vmatprep.subr.mxu0 0.0
        %2354 = vmatpush1.xpose.msra.mxu0 0.0
        %2355 = vmatprep.subr.mxu0 0.0
        %2356 = vmatpush1.xpose.msra.mxu0 0.0
        %2357 = vmatprep.subr.mxu0 0.0
        %2358 = vmatpush1.xpose.msra.mxu0 0.0
        %2359 = vmatprep.subr.mxu0 0.0
        %2360 = vmatpush1.xpose.msra.mxu0 0.0
        %2361 = vmatprep.subr.mxu0 0.0
        %2362 = vmatpush1.xpose.msra.mxu0 0.0
        %2363 = vmatprep.subr.mxu0 0.0
        %2364 = vmatpush1.xpose.msra.mxu0 0.0
        %2365 = vmatprep.subr.mxu0 0.0
        %2366 = vmatpush1.xpose.msra.mxu0 0.0
        %2367 = vmatprep.subr.mxu0 0.0
        %2368 = vmatpush1.xpose.msra.mxu0 0.0
        %2369 = vmatprep.subr.mxu0 0.0
        %2370 = vmatpush1.xpose.msra.mxu0 0.0
        %2371 = vmatprep.subr.mxu0 0.0
        %2372 = vmatpush1.xpose.msra.mxu0 0.0
        %2373 = vmatprep.subr.mxu0 0.0
        %2374 = vmatpush1.xpose.msra.mxu0 0.0
        %2375 = vmatprep.subr.mxu0 0.0
        %2376 = vmatpush1.xpose.msra.mxu0 0.0
        %2377 = vmatprep.subr.mxu0 0.0
        %2378 = vmatpush1.xpose.msra.mxu0 0.0
        %2379 = vmatprep.mubr.f32.mxu0 0.0
        %2380 = vmatmul.mubr.f32.gmra.mrb[0].mxu0 %v581
        %v2381 = vpop.f32.mrb[0].mxu0
        %v2382 = vadd.f32 1e-09, %v2381
        %v2383 = vpop.f32.mrb[0].mxu0
        %2384 = vdwg.mxu0
        %v2385 = vlaneseq
        %v2386 = vshrl.u32 %v2385, 7
        %v2387 = vsub.s32 0, %v2386
        %v2388 = vrot.slane %v2382, %v2387
        %v2389 = vrcp.pop %v2388
        %v2390 = vmul.f32 %v2312, %v2389
        %v2392 = vsel %vm659, %v2390, 0
        %2394 = vmatprep.subr.mxu0 0.0
        %2395 = vmatpush1.msra.mxu0 %v243
        %2396 = vmatprep.subr.mxu0 0.0
        %2397 = vmatpush1.msra.mxu0 %v244
        %2398 = vmatprep.subr.mxu0 0.0
        %2399 = vmatpush1.msra.mxu0 %v245
        %2400 = vmatprep.subr.mxu0 0.0
        %2401 = vmatpush1.msra.mxu0 %v246
        %2402 = vmatprep.subr.mxu0 0.0
        %2403 = vmatpush1.msra.mxu0 %v247
        %2404 = vmatprep.subr.mxu0 0.0
        %2405 = vmatpush1.msra.mxu0 %v248
        %2406 = vmatprep.subr.mxu0 0.0
        %2407 = vmatpush1.msra.mxu0 %v664
        %2408 = vmatprep.subr.mxu0 0.0
        %2409 = vmatpush1.msra.mxu0 0.0
        %2410 = vmatprep.subr.mxu0 0.0
        %2411 = vmatpush1.msra.mxu0 0.0
        %2412 = vmatprep.subr.mxu0 0.0
        %2413 = vmatpush1.msra.mxu0 0.0
        %2414 = vmatprep.subr.mxu0 0.0
        %2415 = vmatpush1.msra.mxu0 0.0
        %2416 = vmatprep.subr.mxu0 0.0
        %2417 = vmatpush1.msra.mxu0 0.0
        %2418 = vmatprep.subr.mxu0 0.0
        %2419 = vmatpush1.msra.mxu0 0.0
        %2420 = vmatprep.subr.mxu0 0.0
        %2421 = vmatpush1.msra.mxu0 0.0
        %2422 = vmatprep.subr.mxu0 0.0
        %2423 = vmatpush1.msra.mxu0 0.0
        %2424 = vmatprep.subr.mxu0 0.0
        %2425 = vmatpush1.msra.mxu0 0.0
        %2426 = vmatprep.subr.mxu0 0.0
        %2427 = vmatpush1.msra.mxu0 0.0
        %2428 = vmatprep.subr.mxu0 0.0
        %2429 = vmatpush1.msra.mxu0 0.0
        %2430 = vmatprep.subr.mxu0 0.0
        %2431 = vmatpush1.msra.mxu0 0.0
        %2432 = vmatprep.subr.mxu0 0.0
        %2433 = vmatpush1.msra.mxu0 0.0
        %2434 = vmatprep.subr.mxu0 0.0
        %2435 = vmatpush1.msra.mxu0 0.0
        %2436 = vmatprep.subr.mxu0 0.0
        %2437 = vmatpush1.msra.mxu0 0.0
        %2438 = vmatprep.subr.mxu0 0.0
        %2439 = vmatpush1.msra.mxu0 0.0
        %2440 = vmatprep.subr.mxu0 0.0
        %2441 = vmatpush1.msra.mxu0 0.0
        %2442 = vmatprep.subr.mxu0 0.0
        %2443 = vmatpush1.msra.mxu0 0.0
        %2444 = vmatprep.subr.mxu0 0.0
        %2445 = vmatpush1.msra.mxu0 0.0
        %2446 = vmatprep.subr.mxu0 0.0
        %2447 = vmatpush1.msra.mxu0 0.0
        %2448 = vmatprep.subr.mxu0 0.0
        %2449 = vmatpush1.msra.mxu0 0.0
        %2450 = vmatprep.subr.mxu0 0.0
        %2451 = vmatpush1.msra.mxu0 0.0
        %2452 = vmatprep.subr.mxu0 0.0
        %2453 = vmatpush1.msra.mxu0 0.0
        %2454 = vmatprep.subr.mxu0 0.0
        %2455 = vmatpush1.msra.mxu0 0.0
        %2456 = vmatprep.subr.mxu0 0.0
        %2457 = vmatpush1.msra.mxu0 0.0
        %2458 = vmatprep.mubr.f32.mxu0 0.0
        %2459 = vmatmul.mubr.f32.gmra.mrb[0].mxu0 %v2392
        %v2460 = vpop.f32.mrb[0].mxu0
        %v2461 = vadd.f32 0.0, %v2460
        %v2462 = vpop.f32.mrb[0].mxu0
        %2463 = vdwg.mxu0
        %v2465 = vsel %vm271, %v2461, 0
        %2467 = vmatprep.subr.mxu0 0.0
        %2468 = vmatpush1.xpose.msra.mxu0 %v324
        %2469 = vmatprep.subr.mxu0 0.0
        %2470 = vmatpush1.xpose.msra.mxu0 %v327
        %2471 = vmatprep.subr.mxu0 0.0
        %2472 = vmatpush1.xpose.msra.mxu0 %v330
        %2473 = vmatprep.subr.mxu0 0.0
        %2474 = vmatpush1.xpose.msra.mxu0 %v333
        %2475 = vmatprep.subr.mxu0 0.0
        %2476 = vmatpush1.xpose.msra.mxu0 %v336
        %2477 = vmatprep.subr.mxu0 0.0
        %2478 = vmatpush1.xpose.msra.mxu0 %v339
        %2479 = vmatprep.subr.mxu0 0.0
        %2480 = vmatpush1.xpose.msra.mxu0 %v342
        %2481 = vmatprep.subr.mxu0 0.0
        %2482 = vmatpush1.xpose.msra.mxu0 0.0
        %2483 = vmatprep.subr.mxu0 0.0
        %2484 = vmatpush1.xpose.msra.mxu0 0.0
        %2485 = vmatprep.subr.mxu0 0.0
        %2486 = vmatpush1.xpose.msra.mxu0 0.0
        %2487 = vmatprep.subr.mxu0 0.0
        %2488 = vmatpush1.xpose.msra.mxu0 0.0
        %2489 = vmatprep.subr.mxu0 0.0
        %2490 = vmatpush1.xpose.msra.mxu0 0.0
        %2491 = vmatprep.subr.mxu0 0.0
        %2492 = vmatpush1.xpose.msra.mxu0 0.0
        %2493 = vmatprep.subr.mxu0 0.0
        %2494 = vmatpush1.xpose.msra.mxu0 0.0
        %2495 = vmatprep.subr.mxu0 0.0
        %2496 = vmatpush1.xpose.msra.mxu0 0.0
        %2497 = vmatprep.subr.mxu0 0.0
        %2498 = vmatpush1.xpose.msra.mxu0 0.0
        %2499 = vmatprep.subr.mxu0 0.0
        %2500 = vmatpush1.xpose.msra.mxu0 0.0
        %2501 = vmatprep.subr.mxu0 0.0
        %2502 = vmatpush1.xpose.msra.mxu0 0.0
        %2503 = vmatprep.subr.mxu0 0.0
        %2504 = vmatpush1.xpose.msra.mxu0 0.0
        %2505 = vmatprep.subr.mxu0 0.0
        %2506 = vmatpush1.xpose.msra.mxu0 0.0
        %2507 = vmatprep.subr.mxu0 0.0
        %2508 = vmatpush1.xpose.msra.mxu0 0.0
        %2509 = vmatprep.subr.mxu0 0.0
        %2510 = vmatpush1.xpose.msra.mxu0 0.0
        %2511 = vmatprep.subr.mxu0 0.0
        %2512 = vmatpush1.xpose.msra.mxu0 0.0
        %2513 = vmatprep.subr.mxu0 0.0
        %2514 = vmatpush1.xpose.msra.mxu0 0.0
        %2515 = vmatprep.subr.mxu0 0.0
        %2516 = vmatpush1.xpose.msra.mxu0 0.0
        %2517 = vmatprep.subr.mxu0 0.0
        %2518 = vmatpush1.xpose.msra.mxu0 0.0
        %2519 = vmatprep.subr.mxu0 0.0
        %2520 = vmatpush1.xpose.msra.mxu0 0.0
        %2521 = vmatprep.subr.mxu0 0.0
        %2522 = vmatpush1.xpose.msra.mxu0 0.0
        %2523 = vmatprep.subr.mxu0 0.0
        %2524 = vmatpush1.xpose.msra.mxu0 0.0
        %2525 = vmatprep.subr.mxu0 0.0
        %2526 = vmatpush1.xpose.msra.mxu0 0.0
        %2527 = vmatprep.subr.mxu0 0.0
        %2528 = vmatpush1.xpose.msra.mxu0 0.0
        %2529 = vmatprep.subr.mxu0 0.0
        %2530 = vmatpush1.xpose.msra.mxu0 0.0
        %2531 = vmatprep.mubr.f32.mxu0 0.0
        %2532 = vmatmul.mubr.f32.gmra.mrb[0].mxu0 %v2465
        %v2533 = vpop.f32.mrb[0].mxu0
        %v2534 = vadd.f32 1e-09, %v2533
        %v2535 = vpop.f32.mrb[0].mxu0
        %2536 = vdwg.mxu0
        %v2537 = vrcp.pop %v2534
        %v2538 = vmul.f32 %v2390, %v2537
        %v2539 = vadd.f32 %v2538, 1e-09
        %v2540 = vlog2.pop %v2539
        %v2541 = vmul.f32 %v2540, 0.6931472
        %v2542 = vmul.f32 %v2538, %v2541
        %v2544 = vsel %vm659, %v2542, 0
        %2546 = vmatprep.subr.mxu0 0.0
        %2547 = vmatpush1.xpose.msra.mxu0 %v2544
        %2548 = vmatprep.subr.mxu0 0.0
        %2549 = vmatpush1.xpose.msra.mxu0 0.0
        %2550 = vmatprep.subr.mxu0 0.0
        %2551 = vmatpush1.xpose.msra.mxu0 0.0
        %2552 = vmatprep.subr.mxu0 0.0
        %2553 = vmatpush1.xpose.msra.mxu0 0.0
        %2554 = vmatprep.subr.mxu0 0.0
        %2555 = vmatpush1.xpose.msra.mxu0 0.0
        %2556 = vmatprep.subr.mxu0 0.0
        %2557 = vmatpush1.xpose.msra.mxu0 0.0
        %2558 = vmatprep.subr.mxu0 0.0
        %2559 = vmatpush1.xpose.msra.mxu0 0.0
        %2560 = vmatprep.subr.mxu0 0.0
        %2561 = vmatpush1.xpose.msra.mxu0 0.0
        %2562 = vmatprep.subr.mxu0 0.0
        %2563 = vmatpush1.xpose.msra.mxu0 0.0
        %2564 = vmatprep.subr.mxu0 0.0
        %2565 = vmatpush1.xpose.msra.mxu0 0.0
        %2566 = vmatprep.subr.mxu0 0.0
        %2567 = vmatpush1.xpose.msra.mxu0 0.0
        %2568 = vmatprep.subr.mxu0 0.0
        %2569 = vmatpush1.xpose.msra.mxu0 0.0
        %2570 = vmatprep.subr.mxu0 0.0
        %2571 = vmatpush1.xpose.msra.mxu0 0.0
        %2572 = vmatprep.subr.mxu0 0.0
        %2573 = vmatpush1.xpose.msra.mxu0 0.0
        %2574 = vmatprep.subr.mxu0 0.0
        %2575 = vmatpush1.xpose.msra.mxu0 0.0
        %2576 = vmatprep.subr.mxu0 0.0
        %2577 = vmatpush1.xpose.msra.mxu0 0.0
        %2578 = vmatprep.subr.mxu0 0.0
        %2579 = vmatpush1.xpose.msra.mxu0 0.0
        %2580 = vmatprep.subr.mxu0 0.0
        %2581 = vmatpush1.xpose.msra.mxu0 0.0
        %2582 = vmatprep.subr.mxu0 0.0
        %2583 = vmatpush1.xpose.msra.mxu0 0.0
        %2584 = vmatprep.subr.mxu0 0.0
        %2585 = vmatpush1.xpose.msra.mxu0 0.0
        %2586 = vmatprep.subr.mxu0 0.0
        %2587 = vmatpush1.xpose.msra.mxu0 0.0
        %2588 = vmatprep.subr.mxu0 0.0
        %2589 = vmatpush1.xpose.msra.mxu0 0.0
        %2590 = vmatprep.subr.mxu0 0.0
        %2591 = vmatpush1.xpose.msra.mxu0 0.0
        %2592 = vmatprep.subr.mxu0 0.0
        %2593 = vmatpush1.xpose.msra.mxu0 0.0
        %2594 = vmatprep.subr.mxu0 0.0
        %2595 = vmatpush1.xpose.msra.mxu0 0.0
        %2596 = vmatprep.subr.mxu0 0.0
        %2597 = vmatpush1.xpose.msra.mxu0 0.0
        %2598 = vmatprep.subr.mxu0 0.0
        %2599 = vmatpush1.xpose.msra.mxu0 0.0
        %2600 = vmatprep.subr.mxu0 0.0
        %2601 = vmatpush1.xpose.msra.mxu0 0.0
        %2602 = vmatprep.subr.mxu0 0.0
        %2603 = vmatpush1.xpose.msra.mxu0 0.0
        %2604 = vmatprep.subr.mxu0 0.0
        %2605 = vmatpush1.xpose.msra.mxu0 0.0
        %2606 = vmatprep.subr.mxu0 0.0
        %2607 = vmatpush1.xpose.msra.mxu0 0.0
        %2608 = vmatprep.subr.mxu0 0.0
        %2609 = vmatpush1.xpose.msra.mxu0 0.0
        %2610 = vmatprep.mubr.f32.mxu0 0.0
        %2611 = vmatmul.mubr.f32.gmra.mrb[0].mxu0 %v848
        %v2612 = vpop.f32.mrb[0].mxu0
        %v2613 = vadd.f32 2.8903718, %v2612
        %v2614 = vpop.f32.mrb[0].mxu0
        %2615 = vdwg.mxu0
        %v2616 = vmul.f32 %v2613, %v923
        %v2617 = vadd.f32 %v2053, %v2616
        %v2618 = vmul.f32 %v2617, 0.25
        %vm2619 = vcmp.ne.f32.partialorder %v2618, %v2618
        %v2620 = vsel %vm2619, 0.0, %v2618
        %vm2621 = vcmask 10240
        %2622 = vst.msk [vmem:[%s201] sm:$0x7] %vm2621, %v2620
        %p2623 = scmp.lt.s32.totalorder %s19, 7
        %s2624 = scalar_select %p2623, %s19, 7
        %s2625 = smul.addr %s2624, 4
        %s2626 = scalar_lea.vmem %s2, %s2625
        // Predicated region
        $region37: #{tpu_custom_call.1} parent=27 // pred_check
          %p2627 = pneg %p89
        $region38: #{tpu_custom_call.1} parent=27 // pred_check_branch
          %2629 = sbr.rel (%p2627) target = $region40
        $region39: #{tpu_custom_call.1} parent=27 // pred_region
          _
        $region40: #{tpu_custom_call.1} parent=27 // pred_fallthru
          _
      $region28: #{tpu_custom_call.1} parent=5 // pred_fallthru
        _
      %p2630 = scmp.le.s32.totalorder 2, %s14
      // Predicated region
      $region41: #{tpu_custom_call.1} parent=5 // pred_check
        %p2631 = pneg %p2630
      $region42: #{tpu_custom_call.1} parent=5 // pred_check_branch
        %2633 = sbr.rel (%p2631) target = $region44
      $region43: #{tpu_custom_call.1} parent=5 // pred_region
        %s2634 = ssub.s32 %s14, 2
        // Predicated region
        $region45: #{tpu_custom_call.1} parent=43 // pred_check
          %p2635 = pneg %p95
        $region46: #{tpu_custom_call.1} parent=43 // pred_check_branch
          %2637 = sbr.rel (%p2635) target = $region48
        $region47: #{tpu_custom_call.1} parent=43 // pred_region
          %p2638 = scmp.lt.s32.totalorder %s20, 7
          %s2639 = scalar_select %p2638, %s20, 7
          %s2640 = smul.addr %s2639, 4
          %s2641 = scalar_lea.vmem %s2, %s2640
        $region48: #{tpu_custom_call.1} parent=43 // pred_fallthru
          _
      $region44: #{tpu_custom_call.1} parent=5 // pred_fallthru
        _
    $region6: #{tpu_custom_call.1} parent=1 // loop_footer
      %s18 = sadd.s32 1, %s14
    $region7: #{tpu_custom_call.1} parent=1 // loop_footer_branch
      %13 = sbr.rel target = $region3
    $region8: #{tpu_custom_call.1} parent=1 // loop_exit
      _
    %2642 = vsyncpa [#allocation3], 1
    %s2643 = scalar_lea.sflag [#allocation3], 1
    %2644 = vsyncpa %s2643, 1
    %2645 = vsyncpa [#allocation5], 1
    %s2646 = scalar_lea.sflag [#allocation5], 1
    %2647 = vsyncpa %s2646, 1

</llo_original>
